<compile_context>
chip_gen: v5e
topology: v5e:2x2
jax: 0.10.0
libtpu: 0.0.40
codegen_flags: <defaults>
</compile_context>

<pallas_src>
import functools
import math
from dataclasses import dataclass

import jax
import jax.numpy as jnp
from jax import lax
from jax.experimental import pallas as pl
from jax.experimental.pallas import tpu as pltpu


# ----------------------------- model config ---------------------------------
@dataclass
class DeepSeekV3ModelArgs:
    vocab_size: int = 256
    dim: int = 64
    inter_dim: int = 128
    n_layers: int = 2
    n_dense_layers: int = 2
    n_heads: int = 4
    q_lora_rank: int = 0
    kv_lora_rank: int = 32
    qk_nope_head_dim: int = 32
    qk_rope_head_dim: int = 16
    v_head_dim: int = 32
    norm_eps: float = 1e-6
    max_seq_len: int = 16
    original_seq_len: int = 16
    rope_theta: float = 10000.0
    rope_factor: float = 40.0
    beta_fast: int = 32
    beta_slow: int = 1
    mscale: float = 1.0
    use_flex_attn: bool = False
    attn_mask_type: str = "causal"


# ----------------------------- tiling helpers --------------------------------
def _pick_tile(dim: int, target: int, quantum: int) -> int:
    """Largest tile <= target that divides dim and is a multiple of quantum;
    falls back to the full dim (always legal per the (8,128) block rule)."""
    if dim <= target:
        return dim
    t = (target // quantum) * quantum
    while t >= quantum:
        if dim % t == 0:
            return t
        t -= quantum
    return dim


# ------------------------- fused transformer layer ---------------------------
def _transformer_layer_kernel(x_ref, cos_ref, sin_ref, anw_ref, wqkva_ref,
                              kvnw_ref, wkbnt_ref, wkbv_ref, wo_ref, fnw_ref,
                              w13_ref, w2_ref, o_ref, attn_scr,
                              *, n_heads, dn, dr, dv, r, inter, eps, scale):
    """One full transformer block for one batch element:
       x -> x + wo(SDPA(MLA(RMSNorm(x)))) -> (+) SwiGLU(RMSNorm(.)) residual."""
    f32 = jnp.float32
    bf16 = jnp.bfloat16
    half = dr // 2
    dq = dn + dr
    nq = n_heads * dq

    x = x_ref[0].astype(f32)                               # (S, D)
    s_len = x.shape[0]
    cos = cos_ref[...]                                     # (S, dr//2) f32
    sin = sin_ref[...]

    # --- attention_norm fused with the joint [wq || wkv_a] projection -------
    xn = (x * lax.rsqrt(jnp.mean(x * x, axis=-1, keepdims=True) + eps)
          * anw_ref[...].astype(f32)).astype(bf16)
    proj = jnp.dot(xn, wqkva_ref[...], preferred_element_type=f32)

    kv_a = proj[:, nq:nq + r]                              # (S, R)   f32
    k_pe = proj[:, nq + r:]                                # (S, dr)  half-split

    # RoPE(k_pe) in f32 (shared across heads; features are [re..., im...]).
    kp1, kp2 = k_pe[:, :half], k_pe[:, half:]
    kr1 = (kp1 * cos - kp2 * sin).astype(bf16)
    kr2 = (kp1 * sin + kp2 * cos).astype(bf16)

    # --- kv_norm fused with wkv_b --------------------------------------------
    kvn = (kv_a * lax.rsqrt(jnp.mean(kv_a * kv_a, axis=-1, keepdims=True) + eps)
           * kvnw_ref[...].astype(f32)).astype(bf16)        # (S, R)
    # k_nope produced directly TRANSPOSED, (H*dn, S): one shared contraction of
    # the pre-transposed weight slab against the kv latent replaces H per-head
    # XLU transposes in the score matmuls.
    knt = lax.dot_general(wkbnt_ref[...], kvn, (((1,), (1,)), ((), ())),
                          preferred_element_type=f32).astype(bf16)
    v_all = jnp.dot(kvn, wkbv_ref[...],
                    preferred_element_type=f32).astype(bf16)  # (S, H*dv)

    # Causal additive mask, shared across heads (f32).
    rows = lax.broadcasted_iota(jnp.int32, (s_len, s_len), 0)
    cols = lax.broadcasted_iota(jnp.int32, (s_len, s_len), 1)
    bias = jnp.where(cols <= rows, 0.0, -1e30).astype(f32)

    for h in range(n_heads):
        base = h * dq
        qn = proj[:, base:base + dn].astype(bf16)
        qp1 = proj[:, base + dn:base + dn + half]
        qp2 = proj[:, base + dn + half:base + dq]
        qr1 = (qp1 * cos - qp2 * sin).astype(bf16)          # RoPE(q_pe), f32 math
        qr2 = (qp1 * sin + qp2 * cos).astype(bf16)

        # scores = q_nope . k_nope^T + q_pe . k_pe^T  (k_pe shared across heads)
        s = jnp.dot(qn, knt[h * dn:(h + 1) * dn, :],
                    preferred_element_type=f32)
        s += lax.dot_general(qr1, kr1, (((1,), (1,)), ((), ())),
                             preferred_element_type=f32)
        s += lax.dot_general(qr2, kr2, (((1,), (1,)), ((), ())),
                             preferred_element_type=f32)
        s = s * scale + bias
        m = jnp.max(s, axis=-1, keepdims=True)
        p = jnp.exp(s - m)
        # approx reciprocal (EUP slot): ~1e-3 rel error vs exact softmax denom.
        p = p * pl.reciprocal(jnp.sum(p, axis=-1, keepdims=True), approx=True)
        # Per-head PV written straight into the (S, H*dv) f32 scratch slice
        # (no list + concatenate on the critical path).
        attn_scr[:, h * dv:(h + 1) * dv] = jnp.dot(
            p.astype(bf16), v_all[:, h * dv:(h + 1) * dv],
            preferred_element_type=f32)

    # --- wo projection with fused residual add --------------------------------
    h_attn = x + jnp.dot(attn_scr[...].astype(bf16), wo_ref[...],
                         preferred_element_type=f32)

    # --- ffn_norm + SwiGLU ([w1 || w3], w2) + residual -------------------------
    hn = (h_attn * lax.rsqrt(jnp.mean(h_attn * h_attn, axis=-1, keepdims=True)
                             + eps) * fnw_ref[...].astype(f32)).astype(bf16)
    h13 = jnp.dot(hn, w13_ref[...], preferred_element_type=f32)
    gate = (jax.nn.silu(h13[:, :inter]) * h13[:, inter:]).astype(bf16)
    ffn = jnp.dot(gate, w2_ref[...], preferred_element_type=f32)
    o_ref[0] = (h_attn + ffn).astype(o_ref.dtype)


def transformer_layer(p, cfg: DeepSeekV3ModelArgs, x, cos, sin, scale):
    B, S, D = x.shape
    H, Dn, Dr, Dv, R = (cfg.n_heads, cfg.qk_nope_head_dim, cfg.qk_rope_head_dim,
                        cfg.v_head_dim, cfg.kv_lora_rank)
    inter = cfg.inter_dim
    nq = H * (Dn + Dr)
    kernel = functools.partial(
        _transformer_layer_kernel, n_heads=H, dn=Dn, dr=Dr, dv=Dv, r=R,
        inter=inter, eps=cfg.norm_eps, scale=scale)
    full = lambda b: (0, 0)
    return pl.pallas_call(
        kernel,
        out_shape=jax.ShapeDtypeStruct((B, S, D), x.dtype),
        grid=(B,),
        in_specs=[
            pl.BlockSpec((1, S, D), lambda b: (b, 0, 0)),       # x
            pl.BlockSpec((S, Dr // 2), full),                   # cos
            pl.BlockSpec((S, Dr // 2), full),                   # sin
            pl.BlockSpec((1, D), full),                         # attn_norm_w
            pl.BlockSpec((D, nq + R + Dr), full),               # [wq || wkv_a]
            pl.BlockSpec((1, R), full),                         # kv_norm_w
            pl.BlockSpec((H * Dn, R), full),                    # wkv_b nope^T
            pl.BlockSpec((R, H * Dv), full),                    # wkv_b v part
            pl.BlockSpec((H * Dv, D), full),                    # wo
            pl.BlockSpec((1, D), full),                         # ffn_norm_w
            pl.BlockSpec((D, 2 * inter), full),                 # [w1 || w3]
            pl.BlockSpec((inter, D), full),                     # w2
        ],
        out_specs=pl.BlockSpec((1, S, D), lambda b: (b, 0, 0)),
        scratch_shapes=[pltpu.VMEM((S, H * Dv), jnp.float32)],
        compiler_params=pltpu.CompilerParams(
            dimension_semantics=("parallel",),
            vmem_limit_bytes=32 * 1024 * 1024),
    )(x, cos, sin, p["attn_norm_w"], p["wq_kva"], p["kv_norm_w"],
      p["wkb_nope_t"], p["wkb_v"], p["wo"], p["ffn_norm_w"], p["w13"], p["w2"])


# -------------------- fused final RMSNorm + output head ----------------------
def _norm_head_kernel(x_ref, g_ref, w_ref, o_ref, xn_ref, *, eps):
    # Normalize once per M tile (first N tile) into VMEM scratch, then reuse
    # across all N tiles of the vocab dimension.
    @pl.when(pl.program_id(1) == 0)
    def _():
        x = x_ref[...].astype(jnp.float32)
        ms = jnp.mean(x * x, axis=-1, keepdims=True)
        xn_ref[...] = (x * lax.rsqrt(ms + eps)
                       * g_ref[...].astype(jnp.float32)).astype(xn_ref.dtype)

    o_ref[...] = jnp.dot(xn_ref[...], w_ref[...],
                         preferred_element_type=jnp.float32).astype(o_ref.dtype)


def norm_head(x, g, w, eps, out_dtype=jnp.float32, tm_target=256,
              tn_target=512):
    """RMSNorm(x) @ w, tiled over (M, N) with the norm hoisted per M tile."""
    lead = x.shape[:-1]
    K = x.shape[-1]
    x2 = x.reshape(-1, K)
    M, N = x2.shape[0], w.shape[1]
    m_quantum = 16 if x.dtype == jnp.bfloat16 else 8   # bf16 sublane packing
    tm = _pick_tile(M, tm_target, m_quantum)
    tn = _pick_tile(N, tn_target, 128)
    out = pl.pallas_call(
        functools.partial(_norm_head_kernel, eps=eps),
        out_shape=jax.ShapeDtypeStruct((M, N), out_dtype),
        grid=(M // tm, N // tn),
        in_specs=[
            pl.BlockSpec((tm, K), lambda i, j: (i, 0)),
            pl.BlockSpec((1, K), lambda i, j: (0, 0)),
            pl.BlockSpec((K, tn), lambda i, j: (0, j)),
        ],
        out_specs=pl.BlockSpec((tm, tn), lambda i, j: (i, j)),
        scratch_shapes=[pltpu.VMEM((tm, K), w.dtype)],
        compiler_params=pltpu.CompilerParams(
            # N must be "arbitrary": scratch reuse relies on j iterating 0..N-1
            # sequentially for each M tile.
            dimension_semantics=("parallel", "arbitrary"),
            vmem_limit_bytes=32 * 1024 * 1024),
    )(x2, g, w)
    return out.reshape(*lead, N)


# --------------------------- rotary embeddings --------------------------------
def precompute_rope_tables(args: DeepSeekV3ModelArgs):
    """Real cos/sin tables, shape (S, Dr//2), matching the reference freqs."""
    dim = args.qk_rope_head_dim
    seqlen = args.max_seq_len
    base = args.rope_theta
    factor = args.rope_factor
    freqs = 1.0 / base ** (jnp.arange(0, dim, 2, dtype=jnp.float32) / dim)
    if seqlen > args.original_seq_len:
        def find_correction_dim(num_rotations):
            return (dim * math.log(args.original_seq_len /
                                   (num_rotations * 2 * math.pi))
                    / (2 * math.log(base)))
        low = max(math.floor(find_correction_dim(args.beta_fast)), 0)
        high = min(math.ceil(find_correction_dim(args.beta_slow)), dim - 1)
        hi = high + 0.001 if low == high else high
        linear_func = (jnp.arange(dim // 2, dtype=jnp.float32) - low) / (hi - low)
        smooth = 1.0 - jnp.clip(linear_func, 0.0, 1.0)
        freqs = freqs / factor * (1.0 - smooth) + freqs * smooth
    t = jnp.arange(seqlen, dtype=jnp.float32)
    ang = jnp.outer(t, freqs)                       # (S, Dr//2)
    return jnp.cos(ang), jnp.sin(ang)


# --------------------------- parameter packing --------------------------------
def _pe_halfsplit_perm(dr):
    """Column permutation taking interleaved RoPE features (re0, im0, re1, ...)
    to half-split (re0..re7, im0..im7).  Applied identically to the q_pe and
    k_pe weight columns; q_pe . k_pe scores are invariant to this relabeling."""
    return list(range(0, dr, 2)) + list(range(1, dr, 2))


def pack_layer_params(ref, cfg: DeepSeekV3ModelArgs):
    """Rearranges reference-layout layer weights into the fused-kernel layout
    (pure column permutations / concatenations -- forward pass unchanged)."""
    H, Dn, Dr, Dv, R = (cfg.n_heads, cfg.qk_nope_head_dim, cfg.qk_rope_head_dim,
                        cfg.v_head_dim, cfg.kv_lora_rank)
    Dq = Dn + Dr
    perm = _pe_halfsplit_perm(Dr)

    q_cols = []
    for h in range(H):
        base = h * Dq
        q_cols += list(range(base, base + Dn)) + [base + Dn + p for p in perm]
    kva_cols = list(range(R)) + [R + p for p in perm]
    nope_cols, v_cols = [], []
    for h in range(H):
        base = h * (Dn + Dv)
        nope_cols += list(range(base, base + Dn))
        v_cols += list(range(base + Dn, base + Dn + Dv))

    wq_p = jnp.take(ref["wq"], jnp.asarray(q_cols, dtype=jnp.int32), axis=1)
    wkva_p = jnp.take(ref["wkv_a"], jnp.asarray(kva_cols, dtype=jnp.int32),
                      axis=1)
    wkb_nope = jnp.take(ref["wkv_b"], jnp.asarray(nope_cols, dtype=jnp.int32),
                        axis=1)
    wkb_v = jnp.take(ref["wkv_b"], jnp.asarray(v_cols, dtype=jnp.int32), axis=1)
    return {
        "attn_norm_w": ref["attn_norm_w"].reshape(1, -1),
        "ffn_norm_w": ref["ffn_norm_w"].reshape(1, -1),
        "kv_norm_w": ref["kv_norm_w"].reshape(1, -1),
        "wq_kva": jnp.concatenate([wq_p, wkva_p], axis=1),
        "wkb_nope_t": wkb_nope.T,                     # (H*Dn, R) pre-transposed
        "wkb_v": wkb_v,                               # (R, H*Dv)
        "wo": ref["wo"],
        "w13": jnp.concatenate([ref["w1"], ref["w3"]], axis=1),
        "w2": ref["w2"],
    }


def _normal(key, shape, std, dtype):
    return (std * jax.random.normal(key, shape, dtype=jnp.float32)).astype(dtype)


def init_params(key, cfg: DeepSeekV3ModelArgs, dtype=jnp.bfloat16):
    if cfg.q_lora_rank != 0:
        # TODO(synk): q_lora_rank > 0 (wq_a / q_norm / wq_b) path not fused.
        raise NotImplementedError("q_lora_rank > 0 not supported")
    if cfg.n_dense_layers != cfg.n_layers:
        # TODO(synk): MoE branch (layer_id >= n_dense_layers) not implemented.
        raise NotImplementedError("MoE layers not supported")
    H = cfg.n_heads
    Dq = cfg.qk_nope_head_dim + cfg.qk_rope_head_dim
    keys = jax.random.split(key, 2 + cfg.n_layers)
    params = {
        "tok_emb": _normal(keys[0], (cfg.vocab_size, cfg.dim), 1.0, dtype),
        "norm_w": jnp.ones((1, cfg.dim), jnp.float32),
        "output_w": _normal(keys[1], (cfg.dim, cfg.vocab_size),
                            cfg.dim ** -0.5, dtype),
        "layers": [],
    }
    for lid in range(cfg.n_layers):
        lk = jax.random.split(keys[2 + lid], 7)
        init_std = 0.02 / (2 * (lid + 1)) ** 0.5
        ref = {
            "attn_norm_w": jnp.ones((cfg.dim,), jnp.float32),
            "ffn_norm_w": jnp.ones((cfg.dim,), jnp.float32),
            "kv_norm_w": jnp.ones((cfg.kv_lora_rank,), jnp.float32),
            "wq": _normal(lk[0], (cfg.dim, H * Dq), 0.02, dtype),
            "wkv_a": _normal(
                lk[1], (cfg.dim, cfg.kv_lora_rank + cfg.qk_rope_head_dim),
                0.02, dtype),
            "wkv_b": _normal(
                lk[2],
                (cfg.kv_lora_rank,
                 H * (cfg.qk_nope_head_dim + cfg.v_head_dim)),
                0.02, dtype),
            "wo": _normal(lk[3], (H * cfg.v_head_dim, cfg.dim), init_std, dtype),
            "w1": _normal(lk[4], (cfg.dim, cfg.inter_dim), 0.02, dtype),
            "w3": _normal(lk[5], (cfg.dim, cfg.inter_dim), 0.02, dtype),
            "w2": _normal(lk[6], (cfg.inter_dim, cfg.dim), init_std, dtype),
        }
        params["layers"].append(pack_layer_params(ref, cfg))
    return params


# --------------------------------- forward ------------------------------------
def deepseek_v3_forward(params, cfg: DeepSeekV3ModelArgs, tokens, cos, sin):
    scale = (cfg.qk_nope_head_dim + cfg.qk_rope_head_dim) ** (-0.5)
    if cfg.max_seq_len > cfg.original_seq_len:
        mscale = 0.1 * cfg.mscale * math.log(cfg.rope_factor) + 1.0
        scale = scale * mscale * mscale

    h = params["tok_emb"][tokens]                    # embedding gather (glue)
    for layer_p in params["layers"]:
        h = transformer_layer(layer_p, cfg, h, cos, sin, scale)
    # final nn.RMSNorm(dim) (eps=None -> f32 finfo eps) fused with the vocab
    # head; logits kept in f32.
    return norm_head(h, params["norm_w"], params["output_w"],
                     eps=float(jnp.finfo(jnp.float32).eps),
                     out_dtype=jnp.float32)


# --------------------------------- main ----------------------------------------
if __name__ == "__main__":
    cfg = DeepSeekV3ModelArgs()
    root_key = jax.random.PRNGKey(0)
    pkey, tkey = jax.random.split(root_key)

    params = init_params(pkey, cfg)
    cos, sin = precompute_rope_tables(cfg)

    batch, seq = 2, cfg.max_seq_len   # seq must equal max_seq_len (matches ref)
    tokens = jax.random.randint(tkey, (batch, seq), 0, cfg.vocab_size,
                                dtype=jnp.int32)

    fwd = jax.jit(lambda p, t: deepseek_v3_forward(p, cfg, t, cos, sin))
    logits = fwd(params, tokens)
    jax.block_until_ready(logits)
    assert logits.shape == (batch, seq, cfg.vocab_size)
    assert bool(jnp.all(jnp.isfinite(logits)))
    print("KERNEL_OK")
</pallas_src>

<mosaic_0001>
module attributes {stable_mosaic.version = 11 : i64} {
  func.func @_norm_head_kernel(%arg0: i32, %arg1: i32, %arg2: memref<32x64xbf16, #tpu.memory_space<vmem>>, %arg3: memref<1x64xf32, #tpu.memory_space<vmem>>, %arg4: memref<64x256xbf16, #tpu.memory_space<vmem>>, %arg5: memref<32x256xf32, #tpu.memory_space<vmem>>, %arg6: memref<32x64xbf16, #tpu.memory_space<vmem>>) attributes {dimension_semantics = [#tpu.dimension_semantics<parallel>, #tpu.dimension_semantics<arbitrary>], iteration_bounds = array<i64: 1, 1>, scalar_prefetch = 0 : i64, scratch_operands = 1 : i64, tpu.core_type = #tpu.core_type<tc>, window_params = [{transform_indices = @transform_0, window_bounds = array<i64: 32, 64>}, {pipeline_mode = #tpu.pipeline_mode<synchronous>, transform_indices = @transform_1, window_bounds = array<i64: 1, 64>}, {transform_indices = @transform_2, window_bounds = array<i64: 64, 256>}, {transform_indices = @transform_3, window_bounds = array<i64: 32, 256>}]} {
    %c0_i32 = arith.constant 0 : i32
    %0 = arith.cmpi eq, %arg1, %c0_i32 : i32
    %1 = arith.extui %0 : i1 to i32
    %c0_i32_0 = arith.constant 0 : i32
    %2 = arith.cmpi ne, %1, %c0_i32_0 : i32
    scf.if %2 {
      %c0_6 = arith.constant 0 : index
      %c0_7 = arith.constant 0 : index
      %7 = vector.load %arg2[%c0_6, %c0_7] : memref<32x64xbf16, #tpu.memory_space<vmem>>, vector<32x64xbf16>
      %8 = arith.extf %7 : vector<32x64xbf16> to vector<32x64xf32>
      %9 = arith.mulf %8, %8 : vector<32x64xf32>
      %cst_8 = arith.constant dense<0.000000e+00> : vector<32xf32>
      %10 = vector.multi_reduction <add>, %9, %cst_8 [1] : vector<32x64xf32> to vector<32xf32>
      %11 = vector.shape_cast %10 : vector<32xf32> to vector<32x1xf32>
      %cst_9 = arith.constant 6.400000e+01 : f32
      %12 = vector.broadcast %cst_9 : f32 to vector<32x1xf32>
      %13 = arith.divf %11, %12 : vector<32x1xf32>
      %cst_10 = arith.constant 1.1920929E-7 : f32
      %14 = vector.broadcast %cst_10 : f32 to vector<32x1xf32>
      %15 = arith.addf %13, %14 : vector<32x1xf32>
      %16 = math.rsqrt %15 : vector<32x1xf32>
      %17 = vector.broadcast %16 : vector<32x1xf32> to vector<32x64xf32>
      %18 = arith.mulf %8, %17 : vector<32x64xf32>
      %c0_11 = arith.constant 0 : index
      %c0_12 = arith.constant 0 : index
      %19 = vector.load %arg3[%c0_11, %c0_12] : memref<1x64xf32, #tpu.memory_space<vmem>>, vector<1x64xf32>
      %20 = vector.broadcast %19 : vector<1x64xf32> to vector<32x64xf32>
      %21 = arith.mulf %18, %20 : vector<32x64xf32>
      %22 = arith.truncf %21 : vector<32x64xf32> to vector<32x64xbf16>
      %c0_13 = arith.constant 0 : index
      %c0_14 = arith.constant 0 : index
      %23 = vector.load %arg6[%c0_13, %c0_14] : memref<32x64xbf16, #tpu.memory_space<vmem>>, vector<32x64xbf16>
      tpu.vector_store %arg6[%c0_13, %c0_14], %22 {strides = array<i32>} : memref<32x64xbf16, #tpu.memory_space<vmem>>, vector<32x64xbf16>,
    } else {
    }
    %c0 = arith.constant 0 : index
    %c0_1 = arith.constant 0 : index
    %3 = vector.load %arg6[%c0, %c0_1] : memref<32x64xbf16, #tpu.memory_space<vmem>>, vector<32x64xbf16>
    %c0_2 = arith.constant 0 : index
    %c0_3 = arith.constant 0 : index
    %4 = vector.load %arg4[%c0_2, %c0_3] : memref<64x256xbf16, #tpu.memory_space<vmem>>, vector<64x256xbf16>
    %cst = arith.constant dense<0.000000e+00> : vector<32x256xf32>
    %5 = tpu.matmul %3, %4, %cst {dimension_numbers = #tpu.dot_dimension_numbers<[1], [0], [0], [1], [0, 0, 1, 1], [], []>} : vector<32x64xbf16>, vector<64x256xbf16>, vector<32x256xf32> -> vector<32x256xf32>
    %c0_4 = arith.constant 0 : index
    %c0_5 = arith.constant 0 : index
    %6 = vector.load %arg5[%c0_4, %c0_5] : memref<32x256xf32, #tpu.memory_space<vmem>>, vector<32x256xf32>
    tpu.vector_store %arg5[%c0_4, %c0_5], %5 {strides = array<i32>} : memref<32x256xf32, #tpu.memory_space<vmem>>, vector<32x256xf32>,
    return
  }
  func.func @transform_0(%arg0: i32, %arg1: i32) -> (i32, i32) {
    %c0_i32 = arith.constant 0 : i32
    %c0_i32_0 = arith.constant 0 : i32
    return %arg0, %c0_i32 : i32, i32
  }
  func.func @transform_1(%arg0: i32, %arg1: i32) -> (i32, i32) {
    %c0_i32 = arith.constant 0 : i32
    %c0_i32_0 = arith.constant 0 : i32
    %c0_i32_1 = arith.constant 0 : i32
    return %c0_i32, %c0_i32_0 : i32, i32
  }
  func.func @transform_2(%arg0: i32, %arg1: i32) -> (i32, i32) {
    %c0_i32 = arith.constant 0 : i32
    %c0_i32_0 = arith.constant 0 : i32
    return %c0_i32, %arg1 : i32, i32
  }
  func.func @transform_3(%arg0: i32, %arg1: i32) -> (i32, i32) {
    %c0_i32 = arith.constant 0 : i32
    return %arg0, %arg1 : i32, i32
  }
}

module attributes {stable_mosaic.version = 11 : i64} {
  func.func @_transformer_layer_kernel(%arg0: i32, %arg1: memref<1x16x64xbf16, #tpu.memory_space<vmem>>, %arg2: memref<16x8xf32, #tpu.memory_space<vmem>>, %arg3: memref<16x8xf32, #tpu.memory_space<vmem>>, %arg4: memref<1x64xf32, #tpu.memory_space<vmem>>, %arg5: memref<64x240xbf16, #tpu.memory_space<vmem>>, %arg6: memref<1x32xf32, #tpu.memory_space<vmem>>, %arg7: memref<128x32xbf16, #tpu.memory_space<vmem>>, %arg8: memref<32x128xbf16, #tpu.memory_space<vmem>>, %arg9: memref<128x64xbf16, #tpu.memory_space<vmem>>, %arg10: memref<1x64xf32, #tpu.memory_space<vmem>>, %arg11: memref<64x256xbf16, #tpu.memory_space<vmem>>, %arg12: memref<128x64xbf16, #tpu.memory_space<vmem>>, %arg13: memref<1x16x64xbf16, #tpu.memory_space<vmem>>, %arg14: memref<16x128xf32, #tpu.memory_space<vmem>>) attributes {dimension_semantics = [#tpu.dimension_semantics<parallel>], iteration_bounds = array<i64: 2>, scalar_prefetch = 0 : i64, scratch_operands = 1 : i64, tpu.core_type = #tpu.core_type<tc>, window_params = [{transform_indices = @transform_0, window_bounds = array<i64: 1, 16, 64>}, {pipeline_mode = #tpu.pipeline_mode<synchronous>, transform_indices = @transform_1, window_bounds = array<i64: 16, 8>}, {pipeline_mode = #tpu.pipeline_mode<synchronous>, transform_indices = @transform_2, window_bounds = array<i64: 16, 8>}, {pipeline_mode = #tpu.pipeline_mode<synchronous>, transform_indices = @transform_3, window_bounds = array<i64: 1, 64>}, {pipeline_mode = #tpu.pipeline_mode<synchronous>, transform_indices = @transform_4, window_bounds = array<i64: 64, 240>}, {pipeline_mode = #tpu.pipeline_mode<synchronous>, transform_indices = @transform_5, window_bounds = array<i64: 1, 32>}, {pipeline_mode = #tpu.pipeline_mode<synchronous>, transform_indices = @transform_6, window_bounds = array<i64: 128, 32>}, {pipeline_mode = #tpu.pipeline_mode<synchronous>, transform_indices = @transform_7, window_bounds = array<i64: 32, 128>}, {pipeline_mode = #tpu.pipeline_mode<synchronous>, transform_indices = @transform_8, window_bounds = array<i64: 128, 64>}, {pipeline_mode = #tpu.pipeline_mode<synchronous>, transform_indices = @transform_9, window_bounds = array<i64: 1, 64>}, {pipeline_mode = #tpu.pipeline_mode<synchronous>, transform_indices = @transform_10, window_bounds = array<i64: 64, 256>}, {pipeline_mode = #tpu.pipeline_mode<synchronous>, transform_indices = @transform_11, window_bounds = array<i64: 128, 64>}, {transform_indices = @transform_12, window_bounds = array<i64: 1, 16, 64>}]} {
    %c0 = arith.constant 0 : index
    %c0_0 = arith.constant 0 : index
    %c0_1 = arith.constant 0 : index
    %0 = vector.load %arg1[%c0, %c0_0, %c0_1] : memref<1x16x64xbf16, #tpu.memory_space<vmem>>, vector<1x16x64xbf16>
    %1 = vector.shape_cast %0 : vector<1x16x64xbf16> to vector<16x64xbf16>
    %2 = arith.extf %1 : vector<16x64xbf16> to vector<16x64xf32>
    %c0_2 = arith.constant 0 : index
    %c0_3 = arith.constant 0 : index
    %3 = vector.load %arg2[%c0_2, %c0_3] : memref<16x8xf32, #tpu.memory_space<vmem>>, vector<16x8xf32>
    %c0_4 = arith.constant 0 : index
    %c0_5 = arith.constant 0 : index
    %4 = vector.load %arg3[%c0_4, %c0_5] : memref<16x8xf32, #tpu.memory_space<vmem>>, vector<16x8xf32>
    %5 = arith.mulf %2, %2 : vector<16x64xf32>
    %cst = arith.constant dense<0.000000e+00> : vector<16xf32>
    %6 = vector.multi_reduction <add>, %5, %cst [1] : vector<16x64xf32> to vector<16xf32>
    %7 = vector.shape_cast %6 : vector<16xf32> to vector<16x1xf32>
    %cst_6 = arith.constant 6.400000e+01 : f32
    %8 = vector.broadcast %cst_6 : f32 to vector<16x1xf32>
    %9 = arith.divf %7, %8 : vector<16x1xf32>
    %cst_7 = arith.constant 9.99999997E-7 : f32
    %10 = vector.broadcast %cst_7 : f32 to vector<16x1xf32>
    %11 = arith.addf %9, %10 : vector<16x1xf32>
    %12 = math.rsqrt %11 : vector<16x1xf32>
    %13 = vector.broadcast %12 : vector<16x1xf32> to vector<16x64xf32>
    %14 = arith.mulf %2, %13 : vector<16x64xf32>
    %c0_8 = arith.constant 0 : index
    %c0_9 = arith.constant 0 : index
    %15 = vector.load %arg4[%c0_8, %c0_9] : memref<1x64xf32, #tpu.memory_space<vmem>>, vector<1x64xf32>
    %16 = vector.broadcast %15 : vector<1x64xf32> to vector<16x64xf32>
    %17 = arith.mulf %14, %16 : vector<16x64xf32>
    %18 = arith.truncf %17 : vector<16x64xf32> to vector<16x64xbf16>
    %c0_10 = arith.constant 0 : index
    %c0_11 = arith.constant 0 : index
    %19 = vector.load %arg5[%c0_10, %c0_11] : memref<64x240xbf16, #tpu.memory_space<vmem>>, vector<64x240xbf16>
    %cst_12 = arith.constant dense<0.000000e+00> : vector<16x240xf32>
    %20 = tpu.matmul %18, %19, %cst_12 {dimension_numbers = #tpu.dot_dimension_numbers<[1], [0], [0], [1], [0, 0, 1, 1], [], []>} : vector<16x64xbf16>, vector<64x240xbf16>, vector<16x240xf32> -> vector<16x240xf32>
    %21 = vector.extract_strided_slice %20 {offsets = [0, 192], sizes = [16, 32], strides = [1, 1]} : vector<16x240xf32> to vector<16x32xf32>
    %22 = vector.extract_strided_slice %20 {offsets = [0, 224], sizes = [16, 16], strides = [1, 1]} : vector<16x240xf32> to vector<16x16xf32>
    %23 = vector.extract_strided_slice %22 {offsets = [0, 0], sizes = [16, 8], strides = [1, 1]} : vector<16x16xf32> to vector<16x8xf32>
    %24 = vector.extract_strided_slice %22 {offsets = [0, 8], sizes = [16, 8], strides = [1, 1]} : vector<16x16xf32> to vector<16x8xf32>
    %25 = arith.mulf %23, %3 : vector<16x8xf32>
    %26 = arith.mulf %24, %4 : vector<16x8xf32>
    %27 = arith.subf %25, %26 : vector<16x8xf32>
    %28 = arith.truncf %27 : vector<16x8xf32> to vector<16x8xbf16>
    %29 = arith.mulf %23, %4 : vector<16x8xf32>
    %30 = arith.mulf %24, %3 : vector<16x8xf32>
    %31 = arith.addf %29, %30 : vector<16x8xf32>
    %32 = arith.truncf %31 : vector<16x8xf32> to vector<16x8xbf16>
    %33 = arith.mulf %21, %21 : vector<16x32xf32>
    %cst_13 = arith.constant dense<0.000000e+00> : vector<16xf32>
    %34 = vector.multi_reduction <add>, %33, %cst_13 [1] : vector<16x32xf32> to vector<16xf32>
    %35 = vector.shape_cast %34 : vector<16xf32> to vector<16x1xf32>
    %cst_14 = arith.constant 3.200000e+01 : f32
    %36 = vector.broadcast %cst_14 : f32 to vector<16x1xf32>
    %37 = arith.divf %35, %36 : vector<16x1xf32>
    %cst_15 = arith.constant 9.99999997E-7 : f32
    %38 = vector.broadcast %cst_15 : f32 to vector<16x1xf32>
    %39 = arith.addf %37, %38 : vector<16x1xf32>
    %40 = math.rsqrt %39 : vector<16x1xf32>
    %41 = vector.broadcast %40 : vector<16x1xf32> to vector<16x32xf32>
    %42 = arith.mulf %21, %41 : vector<16x32xf32>
    %c0_16 = arith.constant 0 : index
    %c0_17 = arith.constant 0 : index
    %43 = vector.load %arg6[%c0_16, %c0_17] : memref<1x32xf32, #tpu.memory_space<vmem>>, vector<1x32xf32>
    %44 = vector.broadcast %43 : vector<1x32xf32> to vector<16x32xf32>
    %45 = arith.mulf %42, %44 : vector<16x32xf32>
    %46 = arith.truncf %45 : vector<16x32xf32> to vector<16x32xbf16>
    %c0_18 = arith.constant 0 : index
    %c0_19 = arith.constant 0 : index
    %47 = vector.load %arg7[%c0_18, %c0_19] : memref<128x32xbf16, #tpu.memory_space<vmem>>, vector<128x32xbf16>
    %cst_20 = arith.constant dense<0.000000e+00> : vector<128x16xf32>
    %48 = tpu.matmul %47, %46, %cst_20 {dimension_numbers = #tpu.dot_dimension_numbers<[1], [1], [0], [0], [0, 0, 1, 0], [], []>} : vector<128x32xbf16>, vector<16x32xbf16>, vector<128x16xf32> -> vector<128x16xf32>
    %49 = arith.truncf %48 : vector<128x16xf32> to vector<128x16xbf16>
    %c0_21 = arith.constant 0 : index
    %c0_22 = arith.constant 0 : index
    %50 = vector.load %arg8[%c0_21, %c0_22] : memref<32x128xbf16, #tpu.memory_space<vmem>>, vector<32x128xbf16>
    %cst_23 = arith.constant dense<0.000000e+00> : vector<16x128xf32>
    %51 = tpu.matmul %46, %50, %cst_23 {dimension_numbers = #tpu.dot_dimension_numbers<[1], [0], [0], [1], [0, 0, 1, 1], [], []>} : vector<16x32xbf16>, vector<32x128xbf16>, vector<16x128xf32> -> vector<16x128xf32>
    %52 = arith.truncf %51 : vector<16x128xf32> to vector<16x128xbf16>
    %53 = tpu.iota {dimensions = array<i32: 0>} : vector<16x16xi32>
    %54 = tpu.iota {dimensions = array<i32: 1>} : vector<16x16xi32>
    %55 = arith.cmpi sle, %54, %53 : vector<16x16xi32>
    %cst_24 = arith.constant 0.000000e+00 : f32
    %cst_25 = arith.constant -1.000000e+30 : f32
    %56 = vector.broadcast %cst_24 : f32 to vector<16x16xf32>
    %57 = vector.broadcast %cst_25 : f32 to vector<16x16xf32>
    %58 = arith.select %55, %56, %57 : vector<16x16xi1>, vector<16x16xf32>
    %59 = vector.extract_strided_slice %20 {offsets = [0, 0], sizes = [16, 32], strides = [1, 1]} : vector<16x240xf32> to vector<16x32xf32>
    %60 = arith.truncf %59 : vector<16x32xf32> to vector<16x32xbf16>
    %61 = vector.extract_strided_slice %20 {offsets = [0, 32], sizes = [16, 8], strides = [1, 1]} : vector<16x240xf32> to vector<16x8xf32>
    %62 = vector.extract_strided_slice %20 {offsets = [0, 40], sizes = [16, 8], strides = [1, 1]} : vector<16x240xf32> to vector<16x8xf32>
    %63 = arith.mulf %61, %3 : vector<16x8xf32>
    %64 = arith.mulf %62, %4 : vector<16x8xf32>
    %65 = arith.subf %63, %64 : vector<16x8xf32>
    %66 = arith.truncf %65 : vector<16x8xf32> to vector<16x8xbf16>
    %67 = arith.mulf %61, %4 : vector<16x8xf32>
    %68 = arith.mulf %62, %3 : vector<16x8xf32>
    %69 = arith.addf %67, %68 : vector<16x8xf32>
    %70 = arith.truncf %69 : vector<16x8xf32> to vector<16x8xbf16>
    %71 = vector.extract_strided_slice %49 {offsets = [0, 0], sizes = [32, 16], strides = [1, 1]} : vector<128x16xbf16> to vector<32x16xbf16>
    %cst_26 = arith.constant dense<0.000000e+00> : vector<16x16xf32>
    %72 = tpu.matmul %60, %71, %cst_26 {dimension_numbers = #tpu.dot_dimension_numbers<[1], [0], [0], [1], [0, 0, 1, 1], [], []>} : vector<16x32xbf16>, vector<32x16xbf16>, vector<16x16xf32> -> vector<16x16xf32>
    %cst_27 = arith.constant dense<0.000000e+00> : vector<16x16xf32>
    %73 = tpu.matmul %66, %28, %cst_27 {dimension_numbers = #tpu.dot_dimension_numbers<[1], [1], [0], [0], [0, 0, 1, 0], [], []>} : vector<16x8xbf16>, vector<16x8xbf16>, vector<16x16xf32> -> vector<16x16xf32>
    %74 = arith.addf %72, %73 : vector<16x16xf32>
    %cst_28 = arith.constant dense<0.000000e+00> : vector<16x16xf32>
    %75 = tpu.matmul %70, %32, %cst_28 {dimension_numbers = #tpu.dot_dimension_numbers<[1], [1], [0], [0], [0, 0, 1, 0], [], []>} : vector<16x8xbf16>, vector<16x8xbf16>, vector<16x16xf32> -> vector<16x16xf32>
    %76 = arith.addf %74, %75 : vector<16x16xf32>
    %cst_29 = arith.constant 0.144337565 : f32
    %77 = vector.broadcast %cst_29 : f32 to vector<16x16xf32>
    %78 = arith.mulf %76, %77 : vector<16x16xf32>
    %79 = arith.addf %78, %58 : vector<16x16xf32>
    %cst_30 = arith.constant dense<0xFF800000> : vector<16xf32>
    %80 = vector.multi_reduction <maximumf>, %79, %cst_30 [1] : vector<16x16xf32> to vector<16xf32>
    %81 = vector.shape_cast %80 : vector<16xf32> to vector<16x1xf32>
    %82 = vector.broadcast %81 : vector<16x1xf32> to vector<16x16xf32>
    %83 = arith.subf %79, %82 : vector<16x16xf32>
    %84 = math.exp %83 : vector<16x16xf32>
    %cst_31 = arith.constant dense<0.000000e+00> : vector<16xf32>
    %85 = vector.multi_reduction <add>, %84, %cst_31 [1] : vector<16x16xf32> to vector<16xf32>
    %86 = vector.shape_cast %85 : vector<16xf32> to vector<16x1xf32>
    %87 = tpu.reciprocal %86 {approx = true} : vector<16x1xf32> -> vector<16x1xf32>
    %88 = vector.broadcast %87 : vector<16x1xf32> to vector<16x16xf32>
    %89 = arith.mulf %84, %88 : vector<16x16xf32>
    %90 = arith.truncf %89 : vector<16x16xf32> to vector<16x16xbf16>
    %91 = vector.extract_strided_slice %52 {offsets = [0, 0], sizes = [16, 32], strides = [1, 1]} : vector<16x128xbf16> to vector<16x32xbf16>
    %cst_32 = arith.constant dense<0.000000e+00> : vector<16x32xf32>
    %92 = tpu.matmul %90, %91, %cst_32 {dimension_numbers = #tpu.dot_dimension_numbers<[1], [0], [0], [1], [0, 0, 1, 1], [], []>} : vector<16x16xbf16>, vector<16x32xbf16>, vector<16x32xf32> -> vector<16x32xf32>
    %c0_33 = arith.constant 0 : index
    %c0_34 = arith.constant 0 : index
    %93 = vector.load %arg14[%c0_33, %c0_34] : memref<16x128xf32, #tpu.memory_space<vmem>>, vector<16x32xf32>
    tpu.vector_store %arg14[%c0_33, %c0_34], %92 {strides = array<i32>} : memref<16x128xf32, #tpu.memory_space<vmem>>, vector<16x32xf32>,
    %94 = vector.extract_strided_slice %20 {offsets = [0, 48], sizes = [16, 32], strides = [1, 1]} : vector<16x240xf32> to vector<16x32xf32>
    %95 = arith.truncf %94 : vector<16x32xf32> to vector<16x32xbf16>
    %96 = vector.extract_strided_slice %20 {offsets = [0, 80], sizes = [16, 8], strides = [1, 1]} : vector<16x240xf32> to vector<16x8xf32>
    %97 = vector.extract_strided_slice %20 {offsets = [0, 88], sizes = [16, 8], strides = [1, 1]} : vector<16x240xf32> to vector<16x8xf32>
    %98 = arith.mulf %96, %3 : vector<16x8xf32>
    %99 = arith.mulf %97, %4 : vector<16x8xf32>
    %100 = arith.subf %98, %99 : vector<16x8xf32>
    %101 = arith.truncf %100 : vector<16x8xf32> to vector<16x8xbf16>
    %102 = arith.mulf %96, %4 : vector<16x8xf32>
    %103 = arith.mulf %97, %3 : vector<16x8xf32>
    %104 = arith.addf %102, %103 : vector<16x8xf32>
    %105 = arith.truncf %104 : vector<16x8xf32> to vector<16x8xbf16>
    %106 = vector.extract_strided_slice %49 {offsets = [32, 0], sizes = [32, 16], strides = [1, 1]} : vector<128x16xbf16> to vector<32x16xbf16>
    %cst_35 = arith.constant dense<0.000000e+00> : vector<16x16xf32>
    %107 = tpu.matmul %95, %106, %cst_35 {dimension_numbers = #tpu.dot_dimension_numbers<[1], [0], [0], [1], [0, 0, 1, 1], [], []>} : vector<16x32xbf16>, vector<32x16xbf16>, vector<16x16xf32> -> vector<16x16xf32>
    %cst_36 = arith.constant dense<0.000000e+00> : vector<16x16xf32>
    %108 = tpu.matmul %101, %28, %cst_36 {dimension_numbers = #tpu.dot_dimension_numbers<[1], [1], [0], [0], [0, 0, 1, 0], [], []>} : vector<16x8xbf16>, vector<16x8xbf16>, vector<16x16xf32> -> vector<16x16xf32>
    %109 = arith.addf %107, %108 : vector<16x16xf32>
    %cst_37 = arith.constant dense<0.000000e+00> : vector<16x16xf32>
    %110 = tpu.matmul %105, %32, %cst_37 {dimension_numbers = #tpu.dot_dimension_numbers<[1], [1], [0], [0], [0, 0, 1, 0], [], []>} : vector<16x8xbf16>, vector<16x8xbf16>, vector<16x16xf32> -> vector<16x16xf32>
    %111 = arith.addf %109, %110 : vector<16x16xf32>
    %cst_38 = arith.constant 0.144337565 : f32
    %112 = vector.broadcast %cst_38 : f32 to vector<16x16xf32>
    %113 = arith.mulf %111, %112 : vector<16x16xf32>
    %114 = arith.addf %113, %58 : vector<16x16xf32>
    %cst_39 = arith.constant dense<0xFF800000> : vector<16xf32>
    %115 = vector.multi_reduction <maximumf>, %114, %cst_39 [1] : vector<16x16xf32> to vector<16xf32>
    %116 = vector.shape_cast %115 : vector<16xf32> to vector<16x1xf32>
    %117 = vector.broadcast %116 : vector<16x1xf32> to vector<16x16xf32>
    %118 = arith.subf %114, %117 : vector<16x16xf32>
    %119 = math.exp %118 : vector<16x16xf32>
    %cst_40 = arith.constant dense<0.000000e+00> : vector<16xf32>
    %120 = vector.multi_reduction <add>, %119, %cst_40 [1] : vector<16x16xf32> to vector<16xf32>
    %121 = vector.shape_cast %120 : vector<16xf32> to vector<16x1xf32>
    %122 = tpu.reciprocal %121 {approx = true} : vector<16x1xf32> -> vector<16x1xf32>
    %123 = vector.broadcast %122 : vector<16x1xf32> to vector<16x16xf32>
    %124 = arith.mulf %119, %123 : vector<16x16xf32>
    %125 = arith.truncf %124 : vector<16x16xf32> to vector<16x16xbf16>
    %126 = vector.extract_strided_slice %52 {offsets = [0, 32], sizes = [16, 32], strides = [1, 1]} : vector<16x128xbf16> to vector<16x32xbf16>
    %cst_41 = arith.constant dense<0.000000e+00> : vector<16x32xf32>
    %127 = tpu.matmul %125, %126, %cst_41 {dimension_numbers = #tpu.dot_dimension_numbers<[1], [0], [0], [1], [0, 0, 1, 1], [], []>} : vector<16x16xbf16>, vector<16x32xbf16>, vector<16x32xf32> -> vector<16x32xf32>
    %c0_42 = arith.constant 0 : index
    %c32 = arith.constant 32 : index
    %128 = vector.load %arg14[%c0_42, %c32] : memref<16x128xf32, #tpu.memory_space<vmem>>, vector<16x32xf32>
    tpu.vector_store %arg14[%c0_42, %c32], %127 {strides = array<i32>} : memref<16x128xf32, #tpu.memory_space<vmem>>, vector<16x32xf32>,
    %129 = vector.extract_strided_slice %20 {offsets = [0, 96], sizes = [16, 32], strides = [1, 1]} : vector<16x240xf32> to vector<16x32xf32>
    %130 = arith.truncf %129 : vector<16x32xf32> to vector<16x32xbf16>
    %131 = vector.extract_strided_slice %20 {offsets = [0, 128], sizes = [16, 8], strides = [1, 1]} : vector<16x240xf32> to vector<16x8xf32>
    %132 = vector.extract_strided_slice %20 {offsets = [0, 136], sizes = [16, 8], strides = [1, 1]} : vector<16x240xf32> to vector<16x8xf32>
    %133 = arith.mulf %131, %3 : vector<16x8xf32>
    %134 = arith.mulf %132, %4 : vector<16x8xf32>
    %135 = arith.subf %133, %134 : vector<16x8xf32>
    %136 = arith.truncf %135 : vector<16x8xf32> to vector<16x8xbf16>
    %137 = arith.mulf %131, %4 : vector<16x8xf32>
    %138 = arith.mulf %132, %3 : vector<16x8xf32>
    %139 = arith.addf %137, %138 : vector<16x8xf32>
    %140 = arith.truncf %139 : vector<16x8xf32> to vector<16x8xbf16>
    %141 = vector.extract_strided_slice %49 {offsets = [64, 0], sizes = [32, 16], strides = [1, 1]} : vector<128x16xbf16> to vector<32x16xbf16>
    %cst_43 = arith.constant dense<0.000000e+00> : vector<16x16xf32>
    %142 = tpu.matmul %130, %141, %cst_43 {dimension_numbers = #tpu.dot_dimension_numbers<[1], [0], [0], [1], [0, 0, 1, 1], [], []>} : vector<16x32xbf16>, vector<32x16xbf16>, vector<16x16xf32> -> vector<16x16xf32>
    %cst_44 = arith.constant dense<0.000000e+00> : vector<16x16xf32>
    %143 = tpu.matmul %136, %28, %cst_44 {dimension_numbers = #tpu.dot_dimension_numbers<[1], [1], [0], [0], [0, 0, 1, 0], [], []>} : vector<16x8xbf16>, vector<16x8xbf16>, vector<16x16xf32> -> vector<16x16xf32>
    %144 = arith.addf %142, %143 : vector<16x16xf32>
    %cst_45 = arith.constant dense<0.000000e+00> : vector<16x16xf32>
    %145 = tpu.matmul %140, %32, %cst_45 {dimension_numbers = #tpu.dot_dimension_numbers<[1], [1], [0], [0], [0, 0, 1, 0], [], []>} : vector<16x8xbf16>, vector<16x8xbf16>, vector<16x16xf32> -> vector<16x16xf32>
    %146 = arith.addf %144, %145 : vector<16x16xf32>
    %cst_46 = arith.constant 0.144337565 : f32
    %147 = vector.broadcast %cst_46 : f32 to vector<16x16xf32>
    %148 = arith.mulf %146, %147 : vector<16x16xf32>
    %149 = arith.addf %148, %58 : vector<16x16xf32>
    %cst_47 = arith.constant dense<0xFF800000> : vector<16xf32>
    %150 = vector.multi_reduction <maximumf>, %149, %cst_47 [1] : vector<16x16xf32> to vector<16xf32>
    %151 = vector.shape_cast %150 : vector<16xf32> to vector<16x1xf32>
    %152 = vector.broadcast %151 : vector<16x1xf32> to vector<16x16xf32>
    %153 = arith.subf %149, %152 : vector<16x16xf32>
    %154 = math.exp %153 : vector<16x16xf32>
    %cst_48 = arith.constant dense<0.000000e+00> : vector<16xf32>
    %155 = vector.multi_reduction <add>, %154, %cst_48 [1] : vector<16x16xf32> to vector<16xf32>
    %156 = vector.shape_cast %155 : vector<16xf32> to vector<16x1xf32>
    %157 = tpu.reciprocal %156 {approx = true} : vector<16x1xf32> -> vector<16x1xf32>
    %158 = vector.broadcast %157 : vector<16x1xf32> to vector<16x16xf32>
    %159 = arith.mulf %154, %158 : vector<16x16xf32>
    %160 = arith.truncf %159 : vector<16x16xf32> to vector<16x16xbf16>
    %161 = vector.extract_strided_slice %52 {offsets = [0, 64], sizes = [16, 32], strides = [1, 1]} : vector<16x128xbf16> to vector<16x32xbf16>
    %cst_49 = arith.constant dense<0.000000e+00> : vector<16x32xf32>
    %162 = tpu.matmul %160, %161, %cst_49 {dimension_numbers = #tpu.dot_dimension_numbers<[1], [0], [0], [1], [0, 0, 1, 1], [], []>} : vector<16x16xbf16>, vector<16x32xbf16>, vector<16x32xf32> -> vector<16x32xf32>
    %c0_50 = arith.constant 0 : index
    %c64 = arith.constant 64 : index
    %163 = vector.load %arg14[%c0_50, %c64] : memref<16x128xf32, #tpu.memory_space<vmem>>, vector<16x32xf32>
    tpu.vector_store %arg14[%c0_50, %c64], %162 {strides = array<i32>} : memref<16x128xf32, #tpu.memory_space<vmem>>, vector<16x32xf32>,
    %164 = vector.extract_strided_slice %20 {offsets = [0, 144], sizes = [16, 32], strides = [1, 1]} : vector<16x240xf32> to vector<16x32xf32>
    %165 = arith.truncf %164 : vector<16x32xf32> to vector<16x32xbf16>
    %166 = vector.extract_strided_slice %20 {offsets = [0, 176], sizes = [16, 8], strides = [1, 1]} : vector<16x240xf32> to vector<16x8xf32>
    %167 = vector.extract_strided_slice %20 {offsets = [0, 184], sizes = [16, 8], strides = [1, 1]} : vector<16x240xf32> to vector<16x8xf32>
    %168 = arith.mulf %166, %3 : vector<16x8xf32>
    %169 = arith.mulf %167, %4 : vector<16x8xf32>
    %170 = arith.subf %168, %169 : vector<16x8xf32>
    %171 = arith.truncf %170 : vector<16x8xf32> to vector<16x8xbf16>
    %172 = arith.mulf %166, %4 : vector<16x8xf32>
    %173 = arith.mulf %167, %3 : vector<16x8xf32>
    %174 = arith.addf %172, %173 : vector<16x8xf32>
    %175 = arith.truncf %174 : vector<16x8xf32> to vector<16x8xbf16>
    %176 = vector.extract_strided_slice %49 {offsets = [96, 0], sizes = [32, 16], strides = [1, 1]} : vector<128x16xbf16> to vector<32x16xbf16>
    %cst_51 = arith.constant dense<0.000000e+00> : vector<16x16xf32>
    %177 = tpu.matmul %165, %176, %cst_51 {dimension_numbers = #tpu.dot_dimension_numbers<[1], [0], [0], [1], [0, 0, 1, 1], [], []>} : vector<16x32xbf16>, vector<32x16xbf16>, vector<16x16xf32> -> vector<16x16xf32>
    %cst_52 = arith.constant dense<0.000000e+00> : vector<16x16xf32>
    %178 = tpu.matmul %171, %28, %cst_52 {dimension_numbers = #tpu.dot_dimension_numbers<[1], [1], [0], [0], [0, 0, 1, 0], [], []>} : vector<16x8xbf16>, vector<16x8xbf16>, vector<16x16xf32> -> vector<16x16xf32>
    %179 = arith.addf %177, %178 : vector<16x16xf32>
    %cst_53 = arith.constant dense<0.000000e+00> : vector<16x16xf32>
    %180 = tpu.matmul %175, %32, %cst_53 {dimension_numbers = #tpu.dot_dimension_numbers<[1], [1], [0], [0], [0, 0, 1, 0], [], []>} : vector<16x8xbf16>, vector<16x8xbf16>, vector<16x16xf32> -> vector<16x16xf32>
    %181 = arith.addf %179, %180 : vector<16x16xf32>
    %cst_54 = arith.constant 0.144337565 : f32
    %182 = vector.broadcast %cst_54 : f32 to vector<16x16xf32>
    %183 = arith.mulf %181, %182 : vector<16x16xf32>
    %184 = arith.addf %183, %58 : vector<16x16xf32>
    %cst_55 = arith.constant dense<0xFF800000> : vector<16xf32>
    %185 = vector.multi_reduction <maximumf>, %184, %cst_55 [1] : vector<16x16xf32> to vector<16xf32>
    %186 = vector.shape_cast %185 : vector<16xf32> to vector<16x1xf32>
    %187 = vector.broadcast %186 : vector<16x1xf32> to vector<16x16xf32>
    %188 = arith.subf %184, %187 : vector<16x16xf32>
    %189 = math.exp %188 : vector<16x16xf32>
    %cst_56 = arith.constant dense<0.000000e+00> : vector<16xf32>
    %190 = vector.multi_reduction <add>, %189, %cst_56 [1] : vector<16x16xf32> to vector<16xf32>
    %191 = vector.shape_cast %190 : vector<16xf32> to vector<16x1xf32>
    %192 = tpu.reciprocal %191 {approx = true} : vector<16x1xf32> -> vector<16x1xf32>
    %193 = vector.broadcast %192 : vector<16x1xf32> to vector<16x16xf32>
    %194 = arith.mulf %189, %193 : vector<16x16xf32>
    %195 = arith.truncf %194 : vector<16x16xf32> to vector<16x16xbf16>
    %196 = vector.extract_strided_slice %52 {offsets = [0, 96], sizes = [16, 32], strides = [1, 1]} : vector<16x128xbf16> to vector<16x32xbf16>
    %cst_57 = arith.constant dense<0.000000e+00> : vector<16x32xf32>
    %197 = tpu.matmul %195, %196, %cst_57 {dimension_numbers = #tpu.dot_dimension_numbers<[1], [0], [0], [1], [0, 0, 1, 1], [], []>} : vector<16x16xbf16>, vector<16x32xbf16>, vector<16x32xf32> -> vector<16x32xf32>
    %c0_58 = arith.constant 0 : index
    %c96 = arith.constant 96 : index
    %198 = vector.load %arg14[%c0_58, %c96] : memref<16x128xf32, #tpu.memory_space<vmem>>, vector<16x32xf32>
    tpu.vector_store %arg14[%c0_58, %c96], %197 {strides = array<i32>} : memref<16x128xf32, #tpu.memory_space<vmem>>, vector<16x32xf32>,
    %c0_59 = arith.constant 0 : index
    %c0_60 = arith.constant 0 : index
    %199 = vector.load %arg14[%c0_59, %c0_60] : memref<16x128xf32, #tpu.memory_space<vmem>>, vector<16x128xf32>
    %200 = arith.truncf %199 : vector<16x128xf32> to vector<16x128xbf16>
    %c0_61 = arith.constant 0 : index
    %c0_62 = arith.constant 0 : index
    %201 = vector.load %arg9[%c0_61, %c0_62] : memref<128x64xbf16, #tpu.memory_space<vmem>>, vector<128x64xbf16>
    %cst_63 = arith.constant dense<0.000000e+00> : vector<16x64xf32>
    %202 = tpu.matmul %200, %201, %cst_63 {dimension_numbers = #tpu.dot_dimension_numbers<[1], [0], [0], [1], [0, 0, 1, 1], [], []>} : vector<16x128xbf16>, vector<128x64xbf16>, vector<16x64xf32> -> vector<16x64xf32>
    %203 = arith.addf %2, %202 : vector<16x64xf32>
    %204 = arith.mulf %203, %203 : vector<16x64xf32>
    %cst_64 = arith.constant dense<0.000000e+00> : vector<16xf32>
    %205 = vector.multi_reduction <add>, %204, %cst_64 [1] : vector<16x64xf32> to vector<16xf32>
    %206 = vector.shape_cast %205 : vector<16xf32> to vector<16x1xf32>
    %cst_65 = arith.constant 6.400000e+01 : f32
    %207 = vector.broadcast %cst_65 : f32 to vector<16x1xf32>
    %208 = arith.divf %206, %207 : vector<16x1xf32>
    %cst_66 = arith.constant 9.99999997E-7 : f32
    %209 = vector.broadcast %cst_66 : f32 to vector<16x1xf32>
    %210 = arith.addf %208, %209 : vector<16x1xf32>
    %211 = math.rsqrt %210 : vector<16x1xf32>
    %212 = vector.broadcast %211 : vector<16x1xf32> to vector<16x64xf32>
    %213 = arith.mulf %203, %212 : vector<16x64xf32>
    %c0_67 = arith.constant 0 : index
    %c0_68 = arith.constant 0 : index
    %214 = vector.load %arg10[%c0_67, %c0_68] : memref<1x64xf32, #tpu.memory_space<vmem>>, vector<1x64xf32>
    %215 = vector.broadcast %214 : vector<1x64xf32> to vector<16x64xf32>
    %216 = arith.mulf %213, %215 : vector<16x64xf32>
    %217 = arith.truncf %216 : vector<16x64xf32> to vector<16x64xbf16>
    %c0_69 = arith.constant 0 : index
    %c0_70 = arith.constant 0 : index
    %218 = vector.load %arg11[%c0_69, %c0_70] : memref<64x256xbf16, #tpu.memory_space<vmem>>, vector<64x256xbf16>
    %cst_71 = arith.constant dense<0.000000e+00> : vector<16x256xf32>
    %219 = tpu.matmul %217, %218, %cst_71 {dimension_numbers = #tpu.dot_dimension_numbers<[1], [0], [0], [1], [0, 0, 1, 1], [], []>} : vector<16x64xbf16>, vector<64x256xbf16>, vector<16x256xf32> -> vector<16x256xf32>
    %220 = vector.extract_strided_slice %219 {offsets = [0, 0], sizes = [16, 128], strides = [1, 1]} : vector<16x256xf32> to vector<16x128xf32>
    %221 = arith.negf %220 : vector<16x128xf32>
    %222 = math.exp %221 : vector<16x128xf32>
    %cst_72 = arith.constant 1.000000e+00 : f32
    %223 = vector.broadcast %cst_72 : f32 to vector<16x128xf32>
    %224 = arith.addf %223, %222 : vector<16x128xf32>
    %225 = arith.divf %223, %224 : vector<16x128xf32>
    %226 = arith.mulf %220, %225 : vector<16x128xf32>
    %227 = vector.extract_strided_slice %219 {offsets = [0, 128], sizes = [16, 128], strides = [1, 1]} : vector<16x256xf32> to vector<16x128xf32>
    %228 = arith.mulf %226, %227 : vector<16x128xf32>
    %229 = arith.truncf %228 : vector<16x128xf32> to vector<16x128xbf16>
    %c0_73 = arith.constant 0 : index
    %c0_74 = arith.constant 0 : index
    %230 = vector.load %arg12[%c0_73, %c0_74] : memref<128x64xbf16, #tpu.memory_space<vmem>>, vector<128x64xbf16>
    %cst_75 = arith.constant dense<0.000000e+00> : vector<16x64xf32>
    %231 = tpu.matmul %229, %230, %cst_75 {dimension_numbers = #tpu.dot_dimension_numbers<[1], [0], [0], [1], [0, 0, 1, 1], [], []>} : vector<16x128xbf16>, vector<128x64xbf16>, vector<16x64xf32> -> vector<16x64xf32>
    %232 = arith.addf %203, %231 : vector<16x64xf32>
    %233 = arith.truncf %232 : vector<16x64xf32> to vector<16x64xbf16>
    %c0_76 = arith.constant 0 : index
    %c0_77 = arith.constant 0 : index
    %c0_78 = arith.constant 0 : index
    %234 = vector.load %arg13[%c0_76, %c0_77, %c0_78] : memref<1x16x64xbf16, #tpu.memory_space<vmem>>, vector<1x16x64xbf16>
    %235 = vector.shape_cast %234 : vector<1x16x64xbf16> to vector<16x64xbf16>
    %236 = vector.shape_cast %233 : vector<16x64xbf16> to vector<1x16x64xbf16>
    tpu.vector_store %arg13[%c0_76, %c0_77, %c0_78], %236 {strides = array<i32>} : memref<1x16x64xbf16, #tpu.memory_space<vmem>>, vector<1x16x64xbf16>,
    return
  }
  func.func @transform_0(%arg0: i32) -> (i32, i32, i32) {
    %c0_i32 = arith.constant 0 : i32
    %c0_i32_0 = arith.constant 0 : i32
    %c0_i32_1 = arith.constant 0 : i32
    return %arg0, %c0_i32, %c0_i32_0 : i32, i32, i32
  }
  func.func @transform_1(%arg0: i32) -> (i32, i32) {
    %c0_i32 = arith.constant 0 : i32
    %c0_i32_0 = arith.constant 0 : i32
    %c0_i32_1 = arith.constant 0 : i32
    return %c0_i32, %c0_i32_0 : i32, i32
  }
  func.func @transform_2(%arg0: i32) -> (i32, i32) {
    %c0_i32 = arith.constant 0 : i32
    %c0_i32_0 = arith.constant 0 : i32
    %c0_i32_1 = arith.constant 0 : i32
    return %c0_i32, %c0_i32_0 : i32, i32
  }
  func.func @transform_3(%arg0: i32) -> (i32, i32) {
    %c0_i32 = arith.constant 0 : i32
    %c0_i32_0 = arith.constant 0 : i32
    %c0_i32_1 = arith.constant 0 : i32
    return %c0_i32, %c0_i32_0 : i32, i32
  }
  func.func @transform_4(%arg0: i32) -> (i32, i32) {
    %c0_i32 = arith.constant 0 : i32
    %c0_i32_0 = arith.constant 0 : i32
    %c0_i32_1 = arith.constant 0 : i32
    return %c0_i32, %c0_i32_0 : i32, i32
  }
  func.func @transform_5(%arg0: i32) -> (i32, i32) {
    %c0_i32 = arith.constant 0 : i32
    %c0_i32_0 = arith.constant 0 : i32
    %c0_i32_1 = arith.constant 0 : i32
    return %c0_i32, %c0_i32_0 : i32, i32
  }
  func.func @transform_6(%arg0: i32) -> (i32, i32) {
    %c0_i32 = arith.constant 0 : i32
    %c0_i32_0 = arith.constant 0 : i32
    %c0_i32_1 = arith.constant 0 : i32
    return %c0_i32, %c0_i32_0 : i32, i32
  }
  func.func @transform_7(%arg0: i32) -> (i32, i32) {
    %c0_i32 = arith.constant 0 : i32
    %c0_i32_0 = arith.constant 0 : i32
    %c0_i32_1 = arith.constant 0 : i32
    return %c0_i32, %c0_i32_0 : i32, i32
  }
  func.func @transform_8(%arg0: i32) -> (i32, i32) {
    %c0_i32 = arith.constant 0 : i32
    %c0_i32_0 = arith.constant 0 : i32
    %c0_i32_1 = arith.constant 0 : i32
    return %c0_i32, %c0_i32_0 : i32, i32
  }
  func.func @transform_9(%arg0: i32) -> (i32, i32) {
    %c0_i32 = arith.constant 0 : i32
    %c0_i32_0 = arith.constant 0 : i32
    %c0_i32_1 = arith.constant 0 : i32
    return %c0_i32, %c0_i32_0 : i32, i32
  }
  func.func @transform_10(%arg0: i32) -> (i32, i32) {
    %c0_i32 = arith.constant 0 : i32
    %c0_i32_0 = arith.constant 0 : i32
    %c0_i32_1 = arith.constant 0 : i32
    return %c0_i32, %c0_i32_0 : i32, i32
  }
  func.func @transform_11(%arg0: i32) -> (i32, i32) {
    %c0_i32 = arith.constant 0 : i32
    %c0_i32_0 = arith.constant 0 : i32
    %c0_i32_1 = arith.constant 0 : i32
    return %c0_i32, %c0_i32_0 : i32, i32
  }
  func.func @transform_12(%arg0: i32) -> (i32, i32, i32) {
    %c0_i32 = arith.constant 0 : i32
    %c0_i32_0 = arith.constant 0 : i32
    %c0_i32_1 = arith.constant 0 : i32
    return %arg0, %c0_i32, %c0_i32_0 : i32, i32, i32
  }
}

</mosaic_0001>

<llo_original>
// kernel: _lambda_.5
$region0: #{_lambda_.5}
  #allocation0 [shape = 'u32[]', space=smem, size = 0x4, offset = 0x4, fixed_abs, tag = 'smem constant byte address 0x4 - core index']
  #allocation1 [shape = 'u32[72,128]{1,0:T(1,128)}', space=vmem, size = 0x9000, scoped, tag = 'internal scratch']
  #allocation2 [shape = 'bf16[32,64]{1,0:T(8,128)(2,1)}', space=vmem, size = 0x2000, scoped, tag = 'scratch operand']
  %s0 = inlined_call_operand.vmem [shape: bf16[32,64], index: 0, kind: input, shape index: {}]
  %s1 = inlined_call_operand.vmem [shape: f32[1,64], index: 1, kind: input, shape index: {}]
  %s2 = inlined_call_operand.vmem [shape: bf16[64,256], index: 2, kind: input, shape index: {}]
  %s3 = inlined_call_operand.hbm [shape: f32[32,256], index: 3, kind: output, shape index: {}]
  %s4 = sld [smem:[#allocation0]]
  $region26: #{_lambda_.5} parent=0
    _
  %s6 = ssub.s32 1, %s4
  %s7 = scalar_select 0, %s6, %s4
  $region1: #{_lambda_.5} parent=0
    #allocation3 [shape = 'u8[32768]{0}', space=vmem, size = 0x8000, scoped, tag = 'output window, operand 0, single buffered']
    #allocation4 [shape = 's32[1]{0}', space=sflag, size = 0x4, scoped, tag = 'scoped memory for _lambda_.5']
    %8 = vsyncpa [#allocation4], 0
    // Predicated region
    $region2: #{_lambda_.5} parent=1 // pred_check
      _
    $region3: #{_lambda_.5} parent=1 // pred_check_branch
      %10 = sbr.rel (0) target = $region5
    $region4: #{_lambda_.5} parent=1 // pred_region
      _
    $region5: #{_lambda_.5} parent=1 // pred_fallthru
      _
    // Predicated region
    $region6: #{_lambda_.5} parent=1 // pred_check
      _
    $region7: #{_lambda_.5} parent=1 // pred_check_branch
      %12 = sbr.rel (0) target = $region9
    $region8: #{_lambda_.5} parent=1 // pred_region
      _
    $region9: #{_lambda_.5} parent=1 // pred_fallthru
      _
    // Predicated region
    $region10: #{_lambda_.5} parent=1 // pred_check
      _
    $region11: #{_lambda_.5} parent=1 // pred_check_branch
      %14 = sbr.rel (0) target = $region13
    $region12: #{_lambda_.5} parent=1 // pred_region
      _
    $region13: #{_lambda_.5} parent=1 // pred_fallthru
      _
    %p16 = scmp.eq.s32.totalorder 0, 0
    // Predicated region
    $region14: #{_lambda_.5} parent=1 // pred_check
      %p17 = pneg %p16
    $region15: #{_lambda_.5} parent=1 // pred_check_branch
      %19 = sbr.rel (%p17) target = $region17
    $region16: #{_lambda_.5} parent=1 // pred_region
      %v20 = vld [vmem:[%s0] sm:$0xf]
      %v21 = vld [vmem:[%s0 + $0x4] sm:$0xf]
      %v22 = vld [vmem:[%s0 + $0x8] sm:$0xf]
      %v23 = vld [vmem:[%s0 + $0xc] sm:$0xf]
      %v24 = vunpack.c.l.bf16 %v20
      %v25 = vunpack.c.l.bf16 %v21
      %v26 = vunpack.c.l.bf16 %v22
      %v27 = vunpack.c.l.bf16 %v23
      %v28 = vmul.f32 %v24, %v24
      %v29 = vmul.f32 %v25, %v25
      %v30 = vmul.f32 %v26, %v26
      %v31 = vmul.f32 %v27, %v27
      %vm32 = vcmask 523264
      %v33 = vsel %vm32, %v28, 0.0
      %34 = vadd.xlane.f32.xlu0 %v33
      %v35 = vpop.xlane.xlu0 %34
      %v36 = vsel %vm32, %v29, 0.0
      %37 = vadd.xlane.f32.xlu0 %v36
      %v38 = vpop.xlane.xlu0 %37
      %v39 = vsel %vm32, %v30, 0.0
      %40 = vadd.xlane.f32.xlu0 %v39
      %v41 = vpop.xlane.xlu0 %40
      %v42 = vsel %vm32, %v31, 0.0
      %43 = vadd.xlane.f32.xlu0 %v42
      %v44 = vpop.xlane.xlu0 %43
      %v45 = vrcp.pop 64.0
      %v46 = vmul.f32 64.0, %v45
      %v47 = vsub.f32 1.0, %v46
      %v48 = vmul.f32 %v45, %v47
      %v49 = vadd.f32 %v45, %v48
      %vm50 = vweird.f32 %v45
      %v51 = vsel %vm50, %v45, %v49
      %v52 = vmul.f32 %v35, %v51
      %v53 = vmul.f32 %v38, %v51
      %v54 = vmul.f32 %v41, %v51
      %v55 = vmul.f32 %v44, %v51
      %v56 = vadd.f32 %v52, 1.1920929e-07
      %v57 = vadd.f32 %v53, 1.1920929e-07
      %v58 = vadd.f32 %v54, 1.1920929e-07
      %v59 = vadd.f32 %v55, 1.1920929e-07
      %v60 = vrsqrt.pop %v56
      %v61 = vmul.f32 %v60, %v56
      %v62 = vmul.f32 %v61, %v60
      %v63 = vmul.f32 0.5, %v62
      %v64 = vsub.f32 1.5, %v63
      %v65 = vmul.f32 %v60, %v64
      %vm66 = vweird.f32 %v56
      %vm67 = vweird.f32 %v60
      %vm68 = vmor %vm66, %vm67
      %v69 = vsel %vm68, %v60, %v65
      %v70 = vrsqrt.pop %v57
      %v71 = vmul.f32 %v70, %v57
      %v72 = vmul.f32 %v71, %v70
      %v73 = vmul.f32 0.5, %v72
      %v74 = vsub.f32 1.5, %v73
      %v75 = vmul.f32 %v70, %v74
      %vm76 = vweird.f32 %v57
      %vm77 = vweird.f32 %v70
      %vm78 = vmor %vm76, %vm77
      %v79 = vsel %vm78, %v70, %v75
      %v80 = vrsqrt.pop %v58
      %v81 = vmul.f32 %v80, %v58
      %v82 = vmul.f32 %v81, %v80
      %v83 = vmul.f32 0.5, %v82
      %v84 = vsub.f32 1.5, %v83
      %v85 = vmul.f32 %v80, %v84
      %vm86 = vweird.f32 %v58
      %vm87 = vweird.f32 %v80
      %vm88 = vmor %vm86, %vm87
      %v89 = vsel %vm88, %v80, %v85
      %v90 = vrsqrt.pop %v59
      %v91 = vmul.f32 %v90, %v59
      %v92 = vmul.f32 %v91, %v90
      %v93 = vmul.f32 0.5, %v92
      %v94 = vsub.f32 1.5, %v93
      %v95 = vmul.f32 %v90, %v94
      %vm96 = vweird.f32 %v59
      %vm97 = vweird.f32 %v90
      %vm98 = vmor %vm96, %vm97
      %v99 = vsel %vm98, %v90, %v95
      %v100 = vmul.f32 %v24, %v69
      %v101 = vmul.f32 %v25, %v79
      %v102 = vmul.f32 %v26, %v89
      %v103 = vmul.f32 %v27, %v99
      %v104 = vld [vmem:[%s1] sm:$0x1]
      %v106 = vperm.slane %v104, 0
      %v108 = vmul.f32 %v100, %v106
      %v109 = vmul.f32 %v101, %v106
      %v110 = vmul.f32 %v102, %v106
      %v111 = vmul.f32 %v103, %v106
      %v112 = vpack.c.bf16 %v108, %v108
      %v113 = vpack.c.bf16 %v109, %v109
      %v114 = vpack.c.bf16 %v110, %v110
      %v115 = vpack.c.bf16 %v111, %v111
      %vm116 = vcmask 519168
      %117 = vst.msk [vmem:[#allocation2] sm:$0xf] %vm116, %v112
      %118 = vst.msk [vmem:[#allocation2 + $0x4] sm:$0xf] %vm116, %v113
      %119 = vst.msk [vmem:[#allocation2 + $0x8] sm:$0xf] %vm116, %v114
      %120 = vst.msk [vmem:[#allocation2 + $0xc] sm:$0xf] %vm116, %v115
    $region17: #{_lambda_.5} parent=1 // pred_fallthru
      _
    %v121 = vld [vmem:[#allocation2] sm:$0xf]
    %v122 = vld [vmem:[#allocation2 + $0x4] sm:$0xf]
    %v123 = vld [vmem:[#allocation2 + $0x8] sm:$0xf]
    %v124 = vld [vmem:[#allocation2 + $0xc] sm:$0xf]
    %v125 = vld [vmem:[%s2] sm:$0xff]
    %v126 = vld [vmem:[%s2 + $0x8] sm:$0xff]
    %v127 = vld [vmem:[%s2 + $0x10] sm:$0xff]
    %v128 = vld [vmem:[%s2 + $0x18] sm:$0xff]
    %v129 = vld [vmem:[%s2 + $0x20] sm:$0xff]
    %v130 = vld [vmem:[%s2 + $0x28] sm:$0xff]
    %v131 = vld [vmem:[%s2 + $0x30] sm:$0xff]
    %v132 = vld [vmem:[%s2 + $0x38] sm:$0xff]
    %v137 = vunpack.c.l.b16 %v121
    %v138 = vunpack.c.l.b16 %v122
    %v139 = vunpack.c.l.b16 %v123
    %v140 = vunpack.c.l.b16 %v124
    %v141 = vpack.c.b16 %v138, %v137
    %v142 = vpack.c.b16 %v140, %v139
    %v151 = vunpack.c.l.b16 %v125
    %v152 = vunpack.c.h.b16 %v125
    %v153 = vunpack.c.l.b16 %v126
    %v154 = vunpack.c.h.b16 %v126
    %v155 = vunpack.c.l.b16 %v127
    %v156 = vunpack.c.h.b16 %v127
    %v157 = vunpack.c.l.b16 %v128
    %v158 = vunpack.c.h.b16 %v128
    %v159 = vunpack.c.l.b16 %v129
    %v160 = vunpack.c.h.b16 %v129
    %v161 = vunpack.c.l.b16 %v130
    %v162 = vunpack.c.h.b16 %v130
    %v163 = vunpack.c.l.b16 %v131
    %v164 = vunpack.c.h.b16 %v131
    %v165 = vunpack.c.l.b16 %v132
    %v166 = vunpack.c.h.b16 %v132
    %v167 = vpack.c.b16 %v153, %v151
    %v168 = vpack.c.b16 %v154, %v152
    %v169 = vpack.c.b16 %v157, %v155
    %v170 = vpack.c.b16 %v158, %v156
    %v171 = vpack.c.b16 %v161, %v159
    %v172 = vpack.c.b16 %v162, %v160
    %v173 = vpack.c.b16 %v165, %v163
    %v174 = vpack.c.b16 %v166, %v164
    %vm183 = vcmask 523264
    %v185 = vsel %vm183, %v141, 0
    %v188 = vsel %vm183, %v142, 0
    %190 = vmatpush.bf16.msra.mxu0 0
    %191 = vmatpush.bf16.msra.mxu0 0
    %192 = vmatpush.bf16.msra.mxu0 0
    %193 = vmatpush.bf16.msra.mxu0 0
    %194 = vmatpush.bf16.msra.mxu0 %v173
    %195 = vmatpush.bf16.msra.mxu0 %v171
    %196 = vmatpush.bf16.msra.mxu0 %v169
    %197 = vmatpush.bf16.msra.mxu0 %v167
    %198 = vmatmul.bf16.gmra.mxu0 %v185
    %v199 = vpop.f32.mrf.mxu0
    %v200 = vadd.f32 0.0, %v199
    %v201 = vpop.f32.mrf.mxu0
    %v202 = vadd.f32 0.0, %v201
    %203 = vmatmul.bf16.gmra.mxu0 %v188
    %v204 = vpop.f32.mrf.mxu0
    %v205 = vadd.f32 0.0, %v204
    %v206 = vpop.f32.mrf.mxu0
    %v207 = vadd.f32 0.0, %v206
    %208 = vdwg.mxu0
    %209 = vmatpush.bf16.msra.mxu0 0
    %210 = vmatpush.bf16.msra.mxu0 0
    %211 = vmatpush.bf16.msra.mxu0 0
    %212 = vmatpush.bf16.msra.mxu0 0
    %213 = vmatpush.bf16.msra.mxu0 %v174
    %214 = vmatpush.bf16.msra.mxu0 %v172
    %215 = vmatpush.bf16.msra.mxu0 %v170
    %216 = vmatpush.bf16.msra.mxu0 %v168
    %217 = vmatmul.bf16.gmra.mxu0 %v185
    %v218 = vpop.f32.mrf.mxu0
    %v219 = vadd.f32 0.0, %v218
    %v220 = vpop.f32.mrf.mxu0
    %v221 = vadd.f32 0.0, %v220
    %222 = vmatmul.bf16.gmra.mxu0 %v188
    %v223 = vpop.f32.mrf.mxu0
    %v224 = vadd.f32 0.0, %v223
    %v225 = vpop.f32.mrf.mxu0
    %v226 = vadd.f32 0.0, %v225
    %227 = vdwg.mxu0
    %228 = vst [vmem:[#allocation3] sm:$0xff] %v200
    %229 = vst [vmem:[#allocation3 + $0x8] sm:$0xff] %v219
    %230 = vst [vmem:[#allocation3 + $0x10] sm:$0xff] %v202
    %231 = vst [vmem:[#allocation3 + $0x18] sm:$0xff] %v221
    %232 = vst [vmem:[#allocation3 + $0x20] sm:$0xff] %v205
    %233 = vst [vmem:[#allocation3 + $0x28] sm:$0xff] %v224
    %234 = vst [vmem:[#allocation3 + $0x30] sm:$0xff] %v207
    %235 = vst [vmem:[#allocation3 + $0x38] sm:$0xff] %v226
    // Predicated region
    $region18: #{_lambda_.5} parent=1 // pred_check
      _
    $region19: #{_lambda_.5} parent=1 // pred_check_branch
      %237 = sbr.rel (0) target = $region21
    $region20: #{_lambda_.5} parent=1 // pred_region
      %239 = vsyncadd [#allocation4], 0
      %s240 = sshll.u32 [#allocation3], 4
      %s241 = int_to_ptr.vmem [resolvable:$true] %s240
      %s242 = sshll.u32 %s3, 4
      %s243 = int_to_ptr.hbm [resolvable:$true] %s242
      %248 = dma.vmem_to_hbm [thread:$0]  %s241, 1024, %s243, [#allocation4], 256, 256, 16
    $region21: #{_lambda_.5} parent=1 // pred_fallthru
      _
    // Predicated region
    $region22: #{_lambda_.5} parent=1 // pred_check
      _
    $region23: #{_lambda_.5} parent=1 // pred_check_branch
      %250 = sbr.rel (0) target = $region25
    $region24: #{_lambda_.5} parent=1 // pred_region
      %252 = dma.done [#allocation4], 1024
    $region25: #{_lambda_.5} parent=1 // pred_fallthru
      _
    %253 = vsyncpa [#allocation4], 1

// kernel: _lambda_.3
$region0: #{_lambda_.3}
  #allocation0 [shape = 'u32[]', space=smem, size = 0x4, offset = 0x4, fixed_abs, tag = 'smem constant byte address 0x4 - core index']
  #allocation1 [shape = 'u32[72,128]{1,0:T(1,128)}', space=vmem, size = 0x9000, scoped, tag = 'internal scratch']
  #allocation2 [shape = 'f32[16,128]{1,0:T(8,128)}', space=vmem, size = 0x2000, scoped, tag = 'scratch operand']
  %s0 = inlined_call_operand.vmem [shape: bf16[2,16,64], index: 0, kind: input, shape index: {}]
  %s1 = inlined_call_operand.vmem [shape: f32[16,8], index: 1, kind: input, shape index: {}]
  %s2 = inlined_call_operand.vmem [shape: f32[16,8], index: 2, kind: input, shape index: {}]
  %s3 = inlined_call_operand.vmem [shape: f32[1,64], index: 3, kind: input, shape index: {}]
  %s4 = inlined_call_operand.vmem [shape: bf16[64,240], index: 4, kind: input, shape index: {}]
  %s5 = inlined_call_operand.vmem [shape: f32[1,32], index: 5, kind: input, shape index: {}]
  %s6 = inlined_call_operand.vmem [shape: bf16[128,32], index: 6, kind: input, shape index: {}]
  %s7 = inlined_call_operand.vmem [shape: bf16[32,128], index: 7, kind: input, shape index: {}]
  %s8 = inlined_call_operand.vmem [shape: bf16[128,64], index: 8, kind: input, shape index: {}]
  %s9 = inlined_call_operand.vmem [shape: f32[1,64], index: 9, kind: input, shape index: {}]
  %s10 = inlined_call_operand.vmem [shape: bf16[64,256], index: 10, kind: input, shape index: {}]
  %s11 = inlined_call_operand.vmem [shape: bf16[128,64], index: 11, kind: input, shape index: {}]
  %s12 = inlined_call_operand.vmem [shape: bf16[2,16,64], index: 12, kind: output, shape index: {}]
  %s13 = sld [smem:[#allocation0]]
  $region81: #{_lambda_.3} parent=0
    _
  %s15 = ssub.s32 1, %s13
  %s16 = scalar_select 0, %s15, %s13
  loop: start=0, step=1, limit=4
  $region2: #{_lambda_.3} parent=0 // loop_pre_header
    _
  $region3: #{_lambda_.3} parent=0 // loop_header
    %s18 = sphi 0, %s22
    %p19 = scmp.ge.s32.totalorder %s18, 4
    %s28 = sphi 0, %s30
    %s31 = sphi 0, %s28
    %s32 = sphi 0, %s31
    %s48 = sphi 0, %s32
    %s52 = sphi 0, %s52
    %s54 = sphi 0, %s52
    %s55 = sphi 0, %s54
    %s69 = sphi 0, %s55
    %s73 = sphi 0, %s73
    %s75 = sphi 0, %s73
    %s76 = sphi 0, %s75
    %s90 = sphi 0, %s76
    %s94 = sphi 0, %s94
    %s96 = sphi 0, %s94
    %s97 = sphi 0, %s96
    %s111 = sphi 0, %s97
    %s115 = sphi 0, %s115
    %s117 = sphi 0, %s115
    %s118 = sphi 0, %s117
    %s132 = sphi 0, %s118
    %s136 = sphi 0, %s136
    %s138 = sphi 0, %s136
    %s139 = sphi 0, %s138
    %s153 = sphi 0, %s139
    %s157 = sphi 0, %s157
    %s159 = sphi 0, %s157
    %s160 = sphi 0, %s159
    %s174 = sphi 0, %s160
    %s178 = sphi 0, %s178
    %s180 = sphi 0, %s178
    %s181 = sphi 0, %s180
    %s195 = sphi 0, %s181
    %s199 = sphi 0, %s199
    %s201 = sphi 0, %s199
    %s202 = sphi 0, %s201
    %s216 = sphi 0, %s202
    %s220 = sphi 0, %s220
    %s222 = sphi 0, %s220
    %s223 = sphi 0, %s222
    %s237 = sphi 0, %s223
    %s241 = sphi 0, %s241
    %s243 = sphi 0, %s241
    %s244 = sphi 0, %s243
    %s258 = sphi 0, %s244
    %s262 = sphi 0, %s262
    %s264 = sphi 0, %s262
    %s265 = sphi 0, %s264
    %s279 = sphi 0, %s265
    %s285 = sphi 0, %s287
    %s288 = sphi 0, %s285
    %s289 = sphi 0, %s288
    %s305 = sphi 0, %s289
  $region4: #{_lambda_.3} parent=0 // loop_header_branch
    %21 = sbr.rel (%p19) target = $region8
  $region5: #{_lambda_.3} parent=0 // loop_body
    %s23 = ssub.s32 %s18, 1
    %s24 = ssub.s32 %s18, 2
    %s25 = sadd.s32 %s18, 1
    %s26 = ssub.s32 %s18, %s25
    %p27 = scmp.eq.s32.totalorder %s26, 0
    %s29 = sadd.s32 %s28, 1
    %s30 = scalar_select %p27, %s28, %s29
    %p33 = pneg %p27
    %p34 = scmp.eq.s32.totalorder %s18, 1
    %p35 = por %p33, %p34
    %p36 = scmp.ne.s32.totalorder %s28, %s31
    %p37 = scmp.eq.s32.totalorder %s18, 0
    %p38 = por %p36, %p37
    %p39 = scmp.ne.s32.totalorder %s28, %s31
    %p40 = scmp.eq.s32.totalorder %s23, 1
    %p41 = por %p39, %p40
    %p42 = scmp.ne.s32.totalorder %s31, %s32
    %p43 = scmp.eq.s32.totalorder %s23, 0
    %p44 = por %p42, %p43
    %p45 = scmp.ne.s32.totalorder %s31, %s32
    %p46 = scmp.eq.s32.totalorder %s24, 1
    %p47 = por %p45, %p46
    %p49 = scmp.ne.s32.totalorder %s32, %s48
    %p50 = scmp.eq.s32.totalorder %s24, 0
    %p51 = por %p49, %p50
    %s53 = sadd.s32 %s52, 1
    %p56 = scmp.eq.s32.totalorder %s18, 1
    %p57 = scmp.ne.s32.totalorder %s52, %s54
    %p58 = scmp.eq.s32.totalorder %s18, 0
    %p59 = por %p57, %p58
    %p60 = scmp.ne.s32.totalorder %s52, %s54
    %p61 = scmp.eq.s32.totalorder %s23, 1
    %p62 = por %p60, %p61
    %p63 = scmp.ne.s32.totalorder %s54, %s55
    %p64 = scmp.eq.s32.totalorder %s23, 0
    %p65 = por %p63, %p64
    %p66 = scmp.ne.s32.totalorder %s54, %s55
    %p67 = scmp.eq.s32.totalorder %s24, 1
    %p68 = por %p66, %p67
    %p70 = scmp.ne.s32.totalorder %s55, %s69
    %p71 = scmp.eq.s32.totalorder %s24, 0
    %p72 = por %p70, %p71
    %s74 = sadd.s32 %s73, 1
    %p77 = scmp.eq.s32.totalorder %s18, 1
    %p78 = scmp.ne.s32.totalorder %s73, %s75
    %p79 = scmp.eq.s32.totalorder %s18, 0
    %p80 = por %p78, %p79
    %p81 = scmp.ne.s32.totalorder %s73, %s75
    %p82 = scmp.eq.s32.totalorder %s23, 1
    %p83 = por %p81, %p82
    %p84 = scmp.ne.s32.totalorder %s75, %s76
    %p85 = scmp.eq.s32.totalorder %s23, 0
    %p86 = por %p84, %p85
    %p87 = scmp.ne.s32.totalorder %s75, %s76
    %p88 = scmp.eq.s32.totalorder %s24, 1
    %p89 = por %p87, %p88
    %p91 = scmp.ne.s32.totalorder %s76, %s90
    %p92 = scmp.eq.s32.totalorder %s24, 0
    %p93 = por %p91, %p92
    %s95 = sadd.s32 %s94, 1
    %p98 = scmp.eq.s32.totalorder %s18, 1
    %p99 = scmp.ne.s32.totalorder %s94, %s96
    %p100 = scmp.eq.s32.totalorder %s18, 0
    %p101 = por %p99, %p100
    %p102 = scmp.ne.s32.totalorder %s94, %s96
    %p103 = scmp.eq.s32.totalorder %s23, 1
    %p104 = por %p102, %p103
    %p105 = scmp.ne.s32.totalorder %s96, %s97
    %p106 = scmp.eq.s32.totalorder %s23, 0
    %p107 = por %p105, %p106
    %p108 = scmp.ne.s32.totalorder %s96, %s97
    %p109 = scmp.eq.s32.totalorder %s24, 1
    %p110 = por %p108, %p109
    %p112 = scmp.ne.s32.totalorder %s97, %s111
    %p113 = scmp.eq.s32.totalorder %s24, 0
    %p114 = por %p112, %p113
    %s116 = sadd.s32 %s115, 1
    %p119 = scmp.eq.s32.totalorder %s18, 1
    %p120 = scmp.ne.s32.totalorder %s115, %s117
    %p121 = scmp.eq.s32.totalorder %s18, 0
    %p122 = por %p120, %p121
    %p123 = scmp.ne.s32.totalorder %s115, %s117
    %p124 = scmp.eq.s32.totalorder %s23, 1
    %p125 = por %p123, %p124
    %p126 = scmp.ne.s32.totalorder %s117, %s118
    %p127 = scmp.eq.s32.totalorder %s23, 0
    %p128 = por %p126, %p127
    %p129 = scmp.ne.s32.totalorder %s117, %s118
    %p130 = scmp.eq.s32.totalorder %s24, 1
    %p131 = por %p129, %p130
    %p133 = scmp.ne.s32.totalorder %s118, %s132
    %p134 = scmp.eq.s32.totalorder %s24, 0
    %p135 = por %p133, %p134
    %s137 = sadd.s32 %s136, 1
    %p140 = scmp.eq.s32.totalorder %s18, 1
    %p141 = scmp.ne.s32.totalorder %s136, %s138
    %p142 = scmp.eq.s32.totalorder %s18, 0
    %p143 = por %p141, %p142
    %p144 = scmp.ne.s32.totalorder %s136, %s138
    %p145 = scmp.eq.s32.totalorder %s23, 1
    %p146 = por %p144, %p145
    %p147 = scmp.ne.s32.totalorder %s138, %s139
    %p148 = scmp.eq.s32.totalorder %s23, 0
    %p149 = por %p147, %p148
    %p150 = scmp.ne.s32.totalorder %s138, %s139
    %p151 = scmp.eq.s32.totalorder %s24, 1
    %p152 = por %p150, %p151
    %p154 = scmp.ne.s32.totalorder %s139, %s153
    %p155 = scmp.eq.s32.totalorder %s24, 0
    %p156 = por %p154, %p155
    %s158 = sadd.s32 %s157, 1
    %p161 = scmp.eq.s32.totalorder %s18, 1
    %p162 = scmp.ne.s32.totalorder %s157, %s159
    %p163 = scmp.eq.s32.totalorder %s18, 0
    %p164 = por %p162, %p163
    %p165 = scmp.ne.s32.totalorder %s157, %s159
    %p166 = scmp.eq.s32.totalorder %s23, 1
    %p167 = por %p165, %p166
    %p168 = scmp.ne.s32.totalorder %s159, %s160
    %p169 = scmp.eq.s32.totalorder %s23, 0
    %p170 = por %p168, %p169
    %p171 = scmp.ne.s32.totalorder %s159, %s160
    %p172 = scmp.eq.s32.totalorder %s24, 1
    %p173 = por %p171, %p172
    %p175 = scmp.ne.s32.totalorder %s160, %s174
    %p176 = scmp.eq.s32.totalorder %s24, 0
    %p177 = por %p175, %p176
    %s179 = sadd.s32 %s178, 1
    %p182 = scmp.eq.s32.totalorder %s18, 1
    %p183 = scmp.ne.s32.totalorder %s178, %s180
    %p184 = scmp.eq.s32.totalorder %s18, 0
    %p185 = por %p183, %p184
    %p186 = scmp.ne.s32.totalorder %s178, %s180
    %p187 = scmp.eq.s32.totalorder %s23, 1
    %p188 = por %p186, %p187
    %p189 = scmp.ne.s32.totalorder %s180, %s181
    %p190 = scmp.eq.s32.totalorder %s23, 0
    %p191 = por %p189, %p190
    %p192 = scmp.ne.s32.totalorder %s180, %s181
    %p193 = scmp.eq.s32.totalorder %s24, 1
    %p194 = por %p192, %p193
    %p196 = scmp.ne.s32.totalorder %s181, %s195
    %p197 = scmp.eq.s32.totalorder %s24, 0
    %p198 = por %p196, %p197
    %s200 = sadd.s32 %s199, 1
    %p203 = scmp.eq.s32.totalorder %s18, 1
    %p204 = scmp.ne.s32.totalorder %s199, %s201
    %p205 = scmp.eq.s32.totalorder %s18, 0
    %p206 = por %p204, %p205
    %p207 = scmp.ne.s32.totalorder %s199, %s201
    %p208 = scmp.eq.s32.totalorder %s23, 1
    %p209 = por %p207, %p208
    %p210 = scmp.ne.s32.totalorder %s201, %s202
    %p211 = scmp.eq.s32.totalorder %s23, 0
    %p212 = por %p210, %p211
    %p213 = scmp.ne.s32.totalorder %s201, %s202
    %p214 = scmp.eq.s32.totalorder %s24, 1
    %p215 = por %p213, %p214
    %p217 = scmp.ne.s32.totalorder %s202, %s216
    %p218 = scmp.eq.s32.totalorder %s24, 0
    %p219 = por %p217, %p218
    %s221 = sadd.s32 %s220, 1
    %p224 = scmp.eq.s32.totalorder %s18, 1
    %p225 = scmp.ne.s32.totalorder %s220, %s222
    %p226 = scmp.eq.s32.totalorder %s18, 0
    %p227 = por %p225, %p226
    %p228 = scmp.ne.s32.totalorder %s220, %s222
    %p229 = scmp.eq.s32.totalorder %s23, 1
    %p230 = por %p228, %p229
    %p231 = scmp.ne.s32.totalorder %s222, %s223
    %p232 = scmp.eq.s32.totalorder %s23, 0
    %p233 = por %p231, %p232
    %p234 = scmp.ne.s32.totalorder %s222, %s223
    %p235 = scmp.eq.s32.totalorder %s24, 1
    %p236 = por %p234, %p235
    %p238 = scmp.ne.s32.totalorder %s223, %s237
    %p239 = scmp.eq.s32.totalorder %s24, 0
    %p240 = por %p238, %p239
    %s242 = sadd.s32 %s241, 1
    %p245 = scmp.eq.s32.totalorder %s18, 1
    %p246 = scmp.ne.s32.totalorder %s241, %s243
    %p247 = scmp.eq.s32.totalorder %s18, 0
    %p248 = por %p246, %p247
    %p249 = scmp.ne.s32.totalorder %s241, %s243
    %p250 = scmp.eq.s32.totalorder %s23, 1
    %p251 = por %p249, %p250
    %p252 = scmp.ne.s32.totalorder %s243, %s244
    %p253 = scmp.eq.s32.totalorder %s23, 0
    %p254 = por %p252, %p253
    %p255 = scmp.ne.s32.totalorder %s243, %s244
    %p256 = scmp.eq.s32.totalorder %s24, 1
    %p257 = por %p255, %p256
    %p259 = scmp.ne.s32.totalorder %s244, %s258
    %p260 = scmp.eq.s32.totalorder %s24, 0
    %p261 = por %p259, %p260
    %s263 = sadd.s32 %s262, 1
    %p266 = scmp.eq.s32.totalorder %s18, 1
    %p267 = scmp.ne.s32.totalorder %s262, %s264
    %p268 = scmp.eq.s32.totalorder %s18, 0
    %p269 = por %p267, %p268
    %p270 = scmp.ne.s32.totalorder %s262, %s264
    %p271 = scmp.eq.s32.totalorder %s23, 1
    %p272 = por %p270, %p271
    %p273 = scmp.ne.s32.totalorder %s264, %s265
    %p274 = scmp.eq.s32.totalorder %s23, 0
    %p275 = por %p273, %p274
    %p276 = scmp.ne.s32.totalorder %s264, %s265
    %p277 = scmp.eq.s32.totalorder %s24, 1
    %p278 = por %p276, %p277
    %p280 = scmp.ne.s32.totalorder %s265, %s279
    %p281 = scmp.eq.s32.totalorder %s24, 0
    %p282 = por %p280, %p281
    %s283 = ssub.s32 %s18, %s25
    %p284 = scmp.eq.s32.totalorder %s283, 0
    %s286 = sadd.s32 %s285, 1
    %s287 = scalar_select %p284, %s285, %s286
    %p290 = pneg %p284
    %p291 = scmp.eq.s32.totalorder %s18, 1
    %p292 = por %p290, %p291
    %p293 = scmp.ne.s32.totalorder %s285, %s288
    %p294 = scmp.eq.s32.totalorder %s18, 0
    %p295 = por %p293, %p294
    %p296 = scmp.ne.s32.totalorder %s285, %s288
    %p297 = scmp.eq.s32.totalorder %s23, 1
    %p298 = por %p296, %p297
    %p299 = scmp.ne.s32.totalorder %s288, %s289
    %p300 = scmp.eq.s32.totalorder %s23, 0
    %p301 = por %p299, %p300
    %p302 = scmp.ne.s32.totalorder %s288, %s289
    %p303 = scmp.eq.s32.totalorder %s24, 1
    %p304 = por %p302, %p303
    %p306 = scmp.ne.s32.totalorder %s289, %s305
    %p307 = scmp.eq.s32.totalorder %s24, 0
    %p308 = por %p306, %p307
    %p309 = scmp.le.s32.totalorder 1, %s18
    %p310 = scmp.lt.s32.totalorder %s18, 3
    %p311 = pnand %p309, %p310
    %p312 = pneg %p311
    // Predicated region
    $region9: #{_lambda_.3} parent=5 // pred_check
      _
    $region10: #{_lambda_.3} parent=5 // pred_check_branch
      %314 = sbr.rel (%p311) target = $region12
    $region11: #{_lambda_.3} parent=5 // pred_region
      %s315 = ssub.s32 %s18, 1
      // Predicated region
      $region13: #{_lambda_.3} parent=11 // pred_check
        %p316 = pneg %p65
      $region14: #{_lambda_.3} parent=11 // pred_check_branch
        %318 = sbr.rel (%p316) target = $region16
      $region15: #{_lambda_.3} parent=11 // pred_region
        _
      $region16: #{_lambda_.3} parent=11 // pred_fallthru
        _
      // Predicated region
      $region17: #{_lambda_.3} parent=11 // pred_check
        %p319 = pneg %p86
      $region18: #{_lambda_.3} parent=11 // pred_check_branch
        %321 = sbr.rel (%p319) target = $region20
      $region19: #{_lambda_.3} parent=11 // pred_region
        _
      $region20: #{_lambda_.3} parent=11 // pred_fallthru
        _
      // Predicated region
      $region21: #{_lambda_.3} parent=11 // pred_check
        %p322 = pneg %p107
      $region22: #{_lambda_.3} parent=11 // pred_check_branch
        %324 = sbr.rel (%p322) target = $region24
      $region23: #{_lambda_.3} parent=11 // pred_region
        _
      $region24: #{_lambda_.3} parent=11 // pred_fallthru
        _
      // Predicated region
      $region25: #{_lambda_.3} parent=11 // pred_check
        %p325 = pneg %p128
      $region26: #{_lambda_.3} parent=11 // pred_check_branch
        %327 = sbr.rel (%p325) target = $region28
      $region27: #{_lambda_.3} parent=11 // pred_region
        _
      $region28: #{_lambda_.3} parent=11 // pred_fallthru
        _
      // Predicated region
      $region29: #{_lambda_.3} parent=11 // pred_check
        %p328 = pneg %p149
      $region30: #{_lambda_.3} parent=11 // pred_check_branch
        %330 = sbr.rel (%p328) target = $region32
      $region31: #{_lambda_.3} parent=11 // pred_region
        _
      $region32: #{_lambda_.3} parent=11 // pred_fallthru
        _
      // Predicated region
      $region33: #{_lambda_.3} parent=11 // pred_check
        %p331 = pneg %p170
      $region34: #{_lambda_.3} parent=11 // pred_check_branch
        %333 = sbr.rel (%p331) target = $region36
      $region35: #{_lambda_.3} parent=11 // pred_region
        _
      $region36: #{_lambda_.3} parent=11 // pred_fallthru
        _
      // Predicated region
      $region37: #{_lambda_.3} parent=11 // pred_check
        %p334 = pneg %p191
      $region38: #{_lambda_.3} parent=11 // pred_check_branch
        %336 = sbr.rel (%p334) target = $region40
      $region39: #{_lambda_.3} parent=11 // pred_region
        _
      $region40: #{_lambda_.3} parent=11 // pred_fallthru
        _
      // Predicated region
      $region41: #{_lambda_.3} parent=11 // pred_check
        %p337 = pneg %p212
      $region42: #{_lambda_.3} parent=11 // pred_check_branch
        %339 = sbr.rel (%p337) target = $region44
      $region43: #{_lambda_.3} parent=11 // pred_region
        _
      $region44: #{_lambda_.3} parent=11 // pred_fallthru
        _
      // Predicated region
      $region45: #{_lambda_.3} parent=11 // pred_check
        %p340 = pneg %p233
      $region46: #{_lambda_.3} parent=11 // pred_check_branch
        %342 = sbr.rel (%p340) target = $region48
      $region47: #{_lambda_.3} parent=11 // pred_region
        _
      $region48: #{_lambda_.3} parent=11 // pred_fallthru
        _
      // Predicated region
      $region49: #{_lambda_.3} parent=11 // pred_check
        %p343 = pneg %p254
      $region50: #{_lambda_.3} parent=11 // pred_check_branch
        %345 = sbr.rel (%p343) target = $region52
      $region51: #{_lambda_.3} parent=11 // pred_region
        _
      $region52: #{_lambda_.3} parent=11 // pred_fallthru
        _
      // Predicated region
      $region53: #{_lambda_.3} parent=11 // pred_check
        %p346 = pneg %p275
      $region54: #{_lambda_.3} parent=11 // pred_check_branch
        %348 = sbr.rel (%p346) target = $region56
      $region55: #{_lambda_.3} parent=11 // pred_region
        _
      $region56: #{_lambda_.3} parent=11 // pred_fallthru
        _
    $region12: #{_lambda_.3} parent=5 // pred_fallthru
      _
    %p349 = scmp.lt.s32.totalorder %s18, 2
    // Predicated region
    $region57: #{_lambda_.3} parent=5 // pred_check
      %p350 = pneg %p349
    $region58: #{_lambda_.3} parent=5 // pred_check_branch
      %352 = sbr.rel (%p350) target = $region60
    $region59: #{_lambda_.3} parent=5 // pred_region
      // Predicated region
      $region61: #{_lambda_.3} parent=59 // pred_check
        %p353 = pneg %p38
      $region62: #{_lambda_.3} parent=59 // pred_check_branch
        %355 = sbr.rel (%p353) target = $region64
      $region63: #{_lambda_.3} parent=59 // pred_region
        %p356 = scmp.lt.s32.totalorder %s18, 1
        %s357 = scalar_select %p356, %s18, 1
        %s358 = smul.addr %s357, 2
        %s359 = smul.addr %s358, 4
        %s360 = scalar_lea.vmem %s0, %s359
      $region64: #{_lambda_.3} parent=59 // pred_fallthru
        _
    $region60: #{_lambda_.3} parent=5 // pred_fallthru
      _
    %p361 = scmp.le.s32.totalorder 1, %s18
    %p362 = scmp.lt.s32.totalorder %s18, 3
    %p363 = pnand %p361, %p362
    %p364 = pneg %p363
    // Predicated region
    $region65: #{_lambda_.3} parent=5 // pred_check
      _
    $region66: #{_lambda_.3} parent=5 // pred_check_branch
      %366 = sbr.rel (%p363) target = $region68
    $region67: #{_lambda_.3} parent=5 // pred_region
      %s367 = ssub.s32 %s18, 1
      %p368 = scmp.lt.s32.totalorder %s23, 1
      %s369 = scalar_select %p368, %s23, 1
      %s370 = smul.addr %s369, 2
      %s371 = smul.addr %s370, 4
      %s372 = scalar_lea.vmem %s0, %s371
      %p373 = pneg %p44
      %p374 = pneg %p41
      %p375 = pneg %p65
      %p376 = pneg %p62
      %p377 = pneg %p86
      %p378 = pneg %p83
      %p379 = pneg %p107
      %p380 = pneg %p104
      %p381 = pneg %p128
      %p382 = pneg %p125
      %p383 = pneg %p149
      %p384 = pneg %p146
      %p385 = pneg %p170
      %p386 = pneg %p167
      %p387 = pneg %p191
      %p388 = pneg %p188
      %p389 = pneg %p212
      %p390 = pneg %p209
      %p391 = pneg %p233
      %p392 = pneg %p230
      %p393 = pneg %p254
      %p394 = pneg %p251
      %p395 = pneg %p275
      %p396 = pneg %p272
      %p397 = pneg %p301
      %p398 = pneg %p298
      %p399 = scmp.lt.s32.totalorder %s23, 1
      %s400 = scalar_select %p399, %s23, 1
      %s401 = smul.addr %s400, 2
      %s402 = smul.addr %s401, 4
      %s403 = scalar_lea.vmem %s12, %s402
      %p404 = scmp.lt.s32.totalorder %s23, 1
      %s405 = scalar_select %p404, %s23, 1
      %s406 = smul.addr %s405, 2
      %s407 = smul.addr %s406, 4
      %s408 = scalar_lea.vmem %s0, %s407
      %p409 = scmp.lt.s32.totalorder %s23, 1
      %s410 = scalar_select %p409, %s23, 1
      %s411 = smul.addr %s410, 2
      %s412 = smul.addr %s411, 4
      %s413 = scalar_lea.vmem %s12, %s412
      %v415 = vld [vmem:[%s408] sm:$0xf]
      %v416 = vld [vmem:[%s408 + $0x4] sm:$0xf]
      %v417 = vunpack.c.l.bf16 %v415
      %v418 = vunpack.c.l.bf16 %v416
      %v419 = vld [vmem:[%s1] sm:$0xff]
      %v420 = vld [vmem:[%s1 + $0x8] sm:$0xff]
      %v421 = vld [vmem:[%s2] sm:$0xff]
      %v422 = vld [vmem:[%s2 + $0x8] sm:$0xff]
      %v423 = vmul.f32 %v417, %v417
      %v424 = vmul.f32 %v418, %v418
      %vm425 = vcmask 523264
      %v426 = vsel %vm425, %v423, 0.0
      %427 = vadd.xlane.f32.xlu0 %v426
      %v428 = vpop.xlane.xlu0 %427
      %v429 = vsel %vm425, %v424, 0.0
      %430 = vadd.xlane.f32.xlu0 %v429
      %v431 = vpop.xlane.xlu0 %430
      %v432 = vrcp.pop 64.0
      %v433 = vmul.f32 64.0, %v432
      %v434 = vsub.f32 1.0, %v433
      %v435 = vmul.f32 %v432, %v434
      %v436 = vadd.f32 %v432, %v435
      %vm437 = vweird.f32 %v432
      %v438 = vsel %vm437, %v432, %v436
      %v439 = vmul.f32 %v428, %v438
      %v440 = vmul.f32 %v431, %v438
      %v441 = vadd.f32 %v439, 1e-06
      %v442 = vadd.f32 %v440, 1e-06
      %v443 = vrsqrt.pop %v441
      %v444 = vmul.f32 %v443, %v441
      %v445 = vmul.f32 %v444, %v443
      %v446 = vmul.f32 0.5, %v445
      %v447 = vsub.f32 1.5, %v446
      %v448 = vmul.f32 %v443, %v447
      %vm449 = vweird.f32 %v441
      %vm450 = vweird.f32 %v443
      %vm451 = vmor %vm449, %vm450
      %v452 = vsel %vm451, %v443, %v448
      %v453 = vrsqrt.pop %v442
      %v454 = vmul.f32 %v453, %v442
      %v455 = vmul.f32 %v454, %v453
      %v456 = vmul.f32 0.5, %v455
      %v457 = vsub.f32 1.5, %v456
      %v458 = vmul.f32 %v453, %v457
      %vm459 = vweird.f32 %v442
      %vm460 = vweird.f32 %v453
      %vm461 = vmor %vm459, %vm460
      %v462 = vsel %vm461, %v453, %v458
      %v463 = vmul.f32 %v417, %v452
      %v464 = vmul.f32 %v418, %v462
      %v465 = vld [vmem:[%s3] sm:$0x1]
      %v467 = vperm.slane %v465, 0
      %v469 = vmul.f32 %v463, %v467
      %v470 = vmul.f32 %v464, %v467
      %v471 = vpack.c.bf16 %v470, %v469
      %v472 = vld [vmem:[%s4] sm:$0xff]
      %v473 = vld [vmem:[%s4 + $0x8] sm:$0xff]
      %v474 = vld [vmem:[%s4 + $0x10] sm:$0xff]
      %v475 = vld [vmem:[%s4 + $0x18] sm:$0xff]
      %v476 = vld [vmem:[%s4 + $0x20] sm:$0xff]
      %v477 = vld [vmem:[%s4 + $0x28] sm:$0xff]
      %v478 = vld [vmem:[%s4 + $0x30] sm:$0xff]
      %v479 = vld [vmem:[%s4 + $0x38] sm:$0xff]
      %v488 = vunpack.c.l.b16 %v472
      %v489 = vunpack.c.h.b16 %v472
      %v490 = vunpack.c.l.b16 %v473
      %v491 = vunpack.c.h.b16 %v473
      %v492 = vunpack.c.l.b16 %v474
      %v493 = vunpack.c.h.b16 %v474
      %v494 = vunpack.c.l.b16 %v475
      %v495 = vunpack.c.h.b16 %v475
      %v496 = vunpack.c.l.b16 %v476
      %v497 = vunpack.c.h.b16 %v476
      %v498 = vunpack.c.l.b16 %v477
      %v499 = vunpack.c.h.b16 %v477
      %v500 = vunpack.c.l.b16 %v478
      %v501 = vunpack.c.h.b16 %v478
      %v502 = vunpack.c.l.b16 %v479
      %v503 = vunpack.c.h.b16 %v479
      %v504 = vpack.c.b16 %v490, %v488
      %v505 = vpack.c.b16 %v491, %v489
      %v506 = vpack.c.b16 %v494, %v492
      %v507 = vpack.c.b16 %v495, %v493
      %v508 = vpack.c.b16 %v498, %v496
      %v509 = vpack.c.b16 %v499, %v497
      %v510 = vpack.c.b16 %v502, %v500
      %v511 = vpack.c.b16 %v503, %v501
      %v521 = vsel %vm425, %v471, 0
      %523 = vmatpush.bf16.msra.mxu0 0
      %524 = vmatpush.bf16.msra.mxu0 0
      %525 = vmatpush.bf16.msra.mxu0 0
      %526 = vmatpush.bf16.msra.mxu0 0
      %527 = vmatpush.bf16.msra.mxu0 %v510
      %528 = vmatpush.bf16.msra.mxu0 %v508
      %529 = vmatpush.bf16.msra.mxu0 %v506
      %530 = vmatpush.bf16.msra.mxu0 %v504
      %531 = vmatmul.bf16.gmra.mxu0 %v521
      %v532 = vpop.f32.mrf.mxu0
      %v533 = vadd.f32 0.0, %v532
      %v534 = vpop.f32.mrf.mxu0
      %v535 = vadd.f32 0.0, %v534
      %536 = vdwg.mxu0
      %537 = vmatpush.bf16.msra.mxu0 0
      %538 = vmatpush.bf16.msra.mxu0 0
      %539 = vmatpush.bf16.msra.mxu0 0
      %540 = vmatpush.bf16.msra.mxu0 0
      %541 = vmatpush.bf16.msra.mxu0 %v511
      %542 = vmatpush.bf16.msra.mxu0 %v509
      %543 = vmatpush.bf16.msra.mxu0 %v507
      %544 = vmatpush.bf16.msra.mxu0 %v505
      %545 = vmatmul.bf16.gmra.mxu0 %v521
      %v546 = vpop.f32.mrf.mxu0
      %v547 = vadd.f32 0.0, %v546
      %v548 = vpop.f32.mrf.mxu0
      %v549 = vadd.f32 0.0, %v548
      %550 = vdwg.mxu0
      %553 = vrot.lane.b32.xlu0 %v419, 96
      %v554 = vpop.permute.xlu0 %553
      %555 = vrot.lane.b32.xlu0 %v420, 96
      %v556 = vpop.permute.xlu0 %555
      %v559 = vmul.f32 %v547, %v554
      %v560 = vmul.f32 %v549, %v556
      %563 = vrot.lane.b32.xlu0 %v421, 104
      %v564 = vpop.permute.xlu0 %563
      %565 = vrot.lane.b32.xlu0 %v422, 104
      %v566 = vpop.permute.xlu0 %565
      %v569 = vmul.f32 %v547, %v564
      %v570 = vmul.f32 %v549, %v566
      %573 = vrot.lane.b32.xlu0 %v569, 120
      %v574 = vpop.permute.xlu0 %573
      %575 = vrot.lane.b32.xlu0 %v570, 120
      %v576 = vpop.permute.xlu0 %575
      %v579 = vsub.f32 %v559, %v574
      %v580 = vsub.f32 %v560, %v576
      %v581 = vpack.c.bf16 %v580, %v579
      %582 = vrot.lane.b32.xlu0 %v421, 96
      %v583 = vpop.permute.xlu0 %582
      %584 = vrot.lane.b32.xlu0 %v422, 96
      %v585 = vpop.permute.xlu0 %584
      %v588 = vmul.f32 %v547, %v583
      %v589 = vmul.f32 %v549, %v585
      %590 = vrot.lane.b32.xlu0 %v419, 104
      %v591 = vpop.permute.xlu0 %590
      %592 = vrot.lane.b32.xlu0 %v420, 104
      %v593 = vpop.permute.xlu0 %592
      %v596 = vmul.f32 %v547, %v591
      %v597 = vmul.f32 %v549, %v593
      %600 = vrot.lane.b32.xlu0 %v596, 120
      %v601 = vpop.permute.xlu0 %600
      %602 = vrot.lane.b32.xlu0 %v597, 120
      %v603 = vpop.permute.xlu0 %602
      %v606 = vadd.f32 %v588, %v601
      %v607 = vadd.f32 %v589, %v603
      %v608 = vpack.c.bf16 %v607, %v606
      %v609 = vmul.f32 %v547, %v547
      %v610 = vmul.f32 %v549, %v549
      %613 = vrot.lane.b32.xlu0 %v609, 64
      %v614 = vpop.permute.xlu0 %613
      %615 = vrot.lane.b32.xlu0 %v610, 64
      %v616 = vpop.permute.xlu0 %615
      %vm619 = vcmask 261120
      %v620 = vsel %vm619, %v614, 0.0
      %621 = vadd.xlane.f32.xlu0 %v620
      %v622 = vpop.xlane.xlu0 %621
      %v623 = vsel %vm619, %v616, 0.0
      %624 = vadd.xlane.f32.xlu0 %v623
      %v625 = vpop.xlane.xlu0 %624
      %v626 = vrcp.pop 32.0
      %v627 = vmul.f32 32.0, %v626
      %v628 = vsub.f32 1.0, %v627
      %v629 = vmul.f32 %v626, %v628
      %v630 = vadd.f32 %v626, %v629
      %vm631 = vweird.f32 %v626
      %v632 = vsel %vm631, %v626, %v630
      %v633 = vmul.f32 %v622, %v632
      %v634 = vmul.f32 %v625, %v632
      %v635 = vadd.f32 %v633, 1e-06
      %v636 = vadd.f32 %v634, 1e-06
      %v637 = vrsqrt.pop %v635
      %v638 = vmul.f32 %v637, %v635
      %v639 = vmul.f32 %v638, %v637
      %v640 = vmul.f32 0.5, %v639
      %v641 = vsub.f32 1.5, %v640
      %v642 = vmul.f32 %v637, %v641
      %vm643 = vweird.f32 %v635
      %vm644 = vweird.f32 %v637
      %vm645 = vmor %vm643, %vm644
      %v646 = vsel %vm645, %v637, %v642
      %v647 = vrsqrt.pop %v636
      %v648 = vmul.f32 %v647, %v636
      %v649 = vmul.f32 %v648, %v647
      %v650 = vmul.f32 0.5, %v649
      %v651 = vsub.f32 1.5, %v650
      %v652 = vmul.f32 %v647, %v651
      %vm653 = vweird.f32 %v636
      %vm654 = vweird.f32 %v647
      %vm655 = vmor %vm653, %vm654
      %v656 = vsel %vm655, %v647, %v652
      %v657 = vmul.f32 %v547, %v646
      %v658 = vmul.f32 %v549, %v656
      %v659 = vld [vmem:[%s5] sm:$0x1]
      %v661 = vperm.slane %v659, 0
      %662 = vrot.lane.b32.xlu0 %v661, 64
      %v663 = vpop.permute.xlu0 %662
      %v665 = vmul.f32 %v657, %v663
      %v666 = vmul.f32 %v658, %v663
      %v667 = vpack.c.bf16 %v666, %v665
      %v668 = vld [vmem:[%s6] sm:$0xf]
      %v669 = vld [vmem:[%s6 + $0x4] sm:$0xf]
      %v670 = vld [vmem:[%s6 + $0x8] sm:$0xf]
      %v671 = vld [vmem:[%s6 + $0xc] sm:$0xf]
      %v672 = vld [vmem:[%s6 + $0x10] sm:$0xf]
      %v673 = vld [vmem:[%s6 + $0x14] sm:$0xf]
      %v674 = vld [vmem:[%s6 + $0x18] sm:$0xf]
      %v675 = vld [vmem:[%s6 + $0x1c] sm:$0xf]
      %v676 = vld [vmem:[%s6 + $0x20] sm:$0xf]
      %v677 = vld [vmem:[%s6 + $0x24] sm:$0xf]
      %v678 = vld [vmem:[%s6 + $0x28] sm:$0xf]
      %v679 = vld [vmem:[%s6 + $0x2c] sm:$0xf]
      %v680 = vld [vmem:[%s6 + $0x30] sm:$0xf]
      %v681 = vld [vmem:[%s6 + $0x34] sm:$0xf]
      %v682 = vld [vmem:[%s6 + $0x38] sm:$0xf]
      %v683 = vld [vmem:[%s6 + $0x3c] sm:$0xf]
      %v700 = vunpack.c.l.b16 %v668
      %v701 = vunpack.c.l.b16 %v669
      %v702 = vunpack.c.l.b16 %v670
      %v703 = vunpack.c.l.b16 %v671
      %v704 = vunpack.c.l.b16 %v672
      %v705 = vunpack.c.l.b16 %v673
      %v706 = vunpack.c.l.b16 %v674
      %v707 = vunpack.c.l.b16 %v675
      %v708 = vunpack.c.l.b16 %v676
      %v709 = vunpack.c.l.b16 %v677
      %v710 = vunpack.c.l.b16 %v678
      %v711 = vunpack.c.l.b16 %v679
      %v712 = vunpack.c.l.b16 %v680
      %v713 = vunpack.c.l.b16 %v681
      %v714 = vunpack.c.l.b16 %v682
      %v715 = vunpack.c.l.b16 %v683
      %v716 = vpack.c.b16 %v701, %v700
      %v717 = vpack.c.b16 %v703, %v702
      %v718 = vpack.c.b16 %v705, %v704
      %v719 = vpack.c.b16 %v707, %v706
      %v720 = vpack.c.b16 %v709, %v708
      %v721 = vpack.c.b16 %v711, %v710
      %v722 = vpack.c.b16 %v713, %v712
      %v723 = vpack.c.b16 %v715, %v714
      %725 = vrot.lane.b32.xlu0 %v667, 64
      %v726 = vpop.permute.xlu0 %725
      %v728 = vsel %vm619, %v716, 0
      %v731 = vsel %vm619, %v717, 0
      %v734 = vsel %vm619, %v718, 0
      %v737 = vsel %vm619, %v719, 0
      %v740 = vsel %vm619, %v720, 0
      %v743 = vsel %vm619, %v721, 0
      %v746 = vsel %vm619, %v722, 0
      %v749 = vsel %vm619, %v723, 0
      %v752 = vsel %vm619, %v726, 0
      %754 = vmatpush.bf16.xpose.msra.mxu0 0
      %755 = vmatpush.bf16.xpose.msra.mxu0 0
      %756 = vmatpush.bf16.xpose.msra.mxu0 0
      %757 = vmatpush.bf16.xpose.msra.mxu0 0
      %758 = vmatpush.bf16.xpose.msra.mxu0 0
      %759 = vmatpush.bf16.xpose.msra.mxu0 0
      %760 = vmatpush.bf16.xpose.msra.mxu0 0
      %761 = vmatpush.bf16.xpose.msra.mxu0 %v752
      %762 = vmatmul.bf16.gmra.mxu0 %v728
      %v763 = vpop.f32.mrf.mxu0
      %v764 = vadd.f32 0.0, %v763
      %v765 = vpop.f32.mrf.mxu0
      %v766 = vadd.f32 0.0, %v765
      %767 = vmatmul.bf16.gmra.mxu0 %v731
      %v768 = vpop.f32.mrf.mxu0
      %v769 = vadd.f32 0.0, %v768
      %v770 = vpop.f32.mrf.mxu0
      %v771 = vadd.f32 0.0, %v770
      %772 = vmatmul.bf16.gmra.mxu0 %v734
      %v773 = vpop.f32.mrf.mxu0
      %v774 = vadd.f32 0.0, %v773
      %v775 = vpop.f32.mrf.mxu0
      %v776 = vadd.f32 0.0, %v775
      %777 = vmatmul.bf16.gmra.mxu0 %v737
      %v778 = vpop.f32.mrf.mxu0
      %v779 = vadd.f32 0.0, %v778
      %v780 = vpop.f32.mrf.mxu0
      %v781 = vadd.f32 0.0, %v780
      %782 = vmatmul.bf16.gmra.mxu0 %v740
      %v783 = vpop.f32.mrf.mxu0
      %v784 = vadd.f32 0.0, %v783
      %v785 = vpop.f32.mrf.mxu0
      %v786 = vadd.f32 0.0, %v785
      %787 = vmatmul.bf16.gmra.mxu0 %v743
      %v788 = vpop.f32.mrf.mxu0
      %v789 = vadd.f32 0.0, %v788
      %v790 = vpop.f32.mrf.mxu0
      %v791 = vadd.f32 0.0, %v790
      %792 = vmatmul.bf16.gmra.mxu0 %v746
      %v793 = vpop.f32.mrf.mxu0
      %v794 = vadd.f32 0.0, %v793
      %v795 = vpop.f32.mrf.mxu0
      %v796 = vadd.f32 0.0, %v795
      %797 = vmatmul.bf16.gmra.mxu0 %v749
      %v798 = vpop.f32.mrf.mxu0
      %v799 = vadd.f32 0.0, %v798
      %v800 = vpop.f32.mrf.mxu0
      %v801 = vadd.f32 0.0, %v800
      %802 = vdwg.mxu0
      %v803 = vpack.c.bf16 %v764, %v764
      %v804 = vpack.c.bf16 %v766, %v766
      %v805 = vpack.c.bf16 %v769, %v769
      %v806 = vpack.c.bf16 %v771, %v771
      %v807 = vpack.c.bf16 %v774, %v774
      %v808 = vpack.c.bf16 %v776, %v776
      %v809 = vpack.c.bf16 %v779, %v779
      %v810 = vpack.c.bf16 %v781, %v781
      %v811 = vpack.c.bf16 %v784, %v784
      %v812 = vpack.c.bf16 %v786, %v786
      %v813 = vpack.c.bf16 %v789, %v789
      %v814 = vpack.c.bf16 %v791, %v791
      %v815 = vpack.c.bf16 %v794, %v794
      %v816 = vpack.c.bf16 %v796, %v796
      %v817 = vpack.c.bf16 %v799, %v799
      %v818 = vpack.c.bf16 %v801, %v801
      %v819 = vld [vmem:[%s7] sm:$0xf]
      %v820 = vld [vmem:[%s7 + $0x4] sm:$0xf]
      %v821 = vld [vmem:[%s7 + $0x8] sm:$0xf]
      %v822 = vld [vmem:[%s7 + $0xc] sm:$0xf]
      %v827 = vunpack.c.l.b16 %v819
      %v828 = vunpack.c.l.b16 %v820
      %v829 = vunpack.c.l.b16 %v821
      %v830 = vunpack.c.l.b16 %v822
      %v831 = vpack.c.b16 %v828, %v827
      %v832 = vpack.c.b16 %v830, %v829
      %835 = vmatpush.bf16.msra.mxu0 0
      %836 = vmatpush.bf16.msra.mxu0 0
      %837 = vmatpush.bf16.msra.mxu0 0
      %838 = vmatpush.bf16.msra.mxu0 0
      %839 = vmatpush.bf16.msra.mxu0 0
      %840 = vmatpush.bf16.msra.mxu0 0
      %841 = vmatpush.bf16.msra.mxu0 %v832
      %842 = vmatpush.bf16.msra.mxu0 %v831
      %843 = vmatmul.bf16.gmra.mxu0 %v752
      %v844 = vpop.f32.mrf.mxu0
      %v845 = vadd.f32 0.0, %v844
      %v846 = vpop.f32.mrf.mxu0
      %v847 = vadd.f32 0.0, %v846
      %848 = vdwg.mxu0
      %v849 = vpack.c.bf16 %v845, %v845
      %v850 = vpack.c.bf16 %v847, %v847
      %v851 = vlaneseq
      %v852 = vshrl.u32 %v851, 7
      %v853 = vadd.s32 %v852, 8
      %v854 = vlaneseq
      %v855 = vand.u32 %v854, 127
      %vm856 = vcmp.le.s32.totalorder %v855, %v852
      %vm857 = vcmp.le.s32.totalorder %v855, %v853
      %v858 = vsel %vm856, 0.0, -1e+30
      %v859 = vsel %vm857, 0.0, -1e+30
      %v860 = vpack.c.bf16 %v535, %v533
      %861 = vrot.lane.b32.xlu0 %v419, 32
      %v862 = vpop.permute.xlu0 %861
      %863 = vrot.lane.b32.xlu0 %v420, 32
      %v864 = vpop.permute.xlu0 %863
      %v867 = vmul.f32 %v533, %v862
      %v868 = vmul.f32 %v535, %v864
      %869 = vrot.lane.b32.xlu0 %v421, 40
      %v870 = vpop.permute.xlu0 %869
      %871 = vrot.lane.b32.xlu0 %v422, 40
      %v872 = vpop.permute.xlu0 %871
      %v875 = vmul.f32 %v533, %v870
      %v876 = vmul.f32 %v535, %v872
      %879 = vrot.lane.b32.xlu0 %v875, 120
      %v880 = vpop.permute.xlu0 %879
      %881 = vrot.lane.b32.xlu0 %v876, 120
      %v882 = vpop.permute.xlu0 %881
      %v885 = vsub.f32 %v867, %v880
      %v886 = vsub.f32 %v868, %v882
      %v887 = vpack.c.bf16 %v886, %v885
      %888 = vrot.lane.b32.xlu0 %v421, 32
      %v889 = vpop.permute.xlu0 %888
      %890 = vrot.lane.b32.xlu0 %v422, 32
      %v891 = vpop.permute.xlu0 %890
      %v894 = vmul.f32 %v533, %v889
      %v895 = vmul.f32 %v535, %v891
      %896 = vrot.lane.b32.xlu0 %v419, 40
      %v897 = vpop.permute.xlu0 %896
      %898 = vrot.lane.b32.xlu0 %v420, 40
      %v899 = vpop.permute.xlu0 %898
      %v902 = vmul.f32 %v533, %v897
      %v903 = vmul.f32 %v535, %v899
      %906 = vrot.lane.b32.xlu0 %v902, 120
      %v907 = vpop.permute.xlu0 %906
      %908 = vrot.lane.b32.xlu0 %v903, 120
      %v909 = vpop.permute.xlu0 %908
      %v912 = vadd.f32 %v894, %v907
      %v913 = vadd.f32 %v895, %v909
      %v914 = vpack.c.bf16 %v913, %v912
      %916 = vrot.lane.b32.xlu0 %v887, 96
      %v917 = vpop.permute.xlu0 %916
      %919 = vrot.lane.b32.xlu0 %v581, 32
      %v920 = vpop.permute.xlu0 %919
      %vm921 = vcmask 64512
      %v923 = vsel %vm921, %v917, 0
      %v926 = vsel %vm921, %v920, 0
      %928 = vmatpush.bf16.xpose.msra.mxu0 0
      %929 = vmatpush.bf16.xpose.msra.mxu0 0
      %930 = vmatpush.bf16.xpose.msra.mxu0 0
      %931 = vmatpush.bf16.xpose.msra.mxu0 0
      %932 = vmatpush.bf16.xpose.msra.mxu0 0
      %933 = vmatpush.bf16.xpose.msra.mxu0 0
      %934 = vmatpush.bf16.xpose.msra.mxu0 0
      %935 = vmatpush.bf16.xpose.msra.mxu0 %v926
      %936 = vmatmul.bf16.gmra.mxu0 %v923
      %v937 = vpop.f32.mrf.mxu0
      %v938 = vadd.f32 0.0, %v937
      %v939 = vpop.f32.mrf.mxu0
      %v940 = vadd.f32 0.0, %v939
      %941 = vdwg.mxu0
      %v946 = vunpack.c.l.b16 %v803
      %v947 = vunpack.c.l.b16 %v804
      %v948 = vunpack.c.l.b16 %v805
      %v949 = vunpack.c.l.b16 %v806
      %v950 = vpack.c.b16 %v947, %v946
      %v951 = vpack.c.b16 %v949, %v948
      %v955 = vsel %vm619, %v860, 0
      %957 = vmatpush.bf16.msra.mxu0 0
      %958 = vmatpush.bf16.msra.mxu0 0
      %959 = vmatpush.bf16.msra.mxu0 0
      %960 = vmatpush.bf16.msra.mxu0 0
      %961 = vmatpush.bf16.msra.mxu0 0
      %962 = vmatpush.bf16.msra.mxu0 0
      %963 = vmatpush.bf16.msra.mxu0 %v951
      %964 = vmatpush.bf16.msra.mxu0 %v950
      %965 = vmatmul.bf16.gmra.mxu0 %v955
      %v966 = vpop.f32.mrf.mxu0
      %v967 = vadd.f32 %v938, %v966
      %v968 = vpop.f32.mrf.mxu0
      %v969 = vadd.f32 %v940, %v968
      %970 = vdwg.mxu0
      %972 = vrot.lane.b32.xlu0 %v914, 96
      %v973 = vpop.permute.xlu0 %972
      %975 = vrot.lane.b32.xlu0 %v608, 32
      %v976 = vpop.permute.xlu0 %975
      %v978 = vsel %vm921, %v973, 0
      %v981 = vsel %vm921, %v976, 0
      %983 = vmatpush.bf16.xpose.msra.mxu0 0
      %984 = vmatpush.bf16.xpose.msra.mxu0 0
      %985 = vmatpush.bf16.xpose.msra.mxu0 0
      %986 = vmatpush.bf16.xpose.msra.mxu0 0
      %987 = vmatpush.bf16.xpose.msra.mxu0 0
      %988 = vmatpush.bf16.xpose.msra.mxu0 0
      %989 = vmatpush.bf16.xpose.msra.mxu0 0
      %990 = vmatpush.bf16.xpose.msra.mxu0 %v981
      %991 = vmatmul.bf16.gmra.mxu0 %v978
      %v992 = vpop.f32.mrf.mxu0
      %v993 = vadd.f32 0.0, %v992
      %v994 = vpop.f32.mrf.mxu0
      %v995 = vadd.f32 0.0, %v994
      %996 = vdwg.mxu0
      %v997 = vadd.f32 %v967, %v993
      %v998 = vadd.f32 %v969, %v995
      %v999 = vmul.f32 %v997, 0.14433756
      %v1000 = vmul.f32 %v998, 0.14433756
      %v1001 = vadd.f32 %v999, %v858
      %v1002 = vadd.f32 %v1000, %v859
      %vm1003 = vcmask 130048
      %v1004 = vsel %vm1003, %v1001, -inf
      %1005 = vmax.xlane.f32.xlu0 %v1004
      %v1006 = vpop.xlane.xlu0 %1005
      %v1007 = vsel %vm1003, %v1002, -inf
      %1008 = vmax.xlane.f32.xlu0 %v1007
      %v1009 = vpop.xlane.xlu0 %1008
      %v1010 = vsub.f32 %v1001, %v1006
      %v1011 = vsub.f32 %v1002, %v1009
      %v1012 = vmul.f32 %v1010, 1.442695
      %v1013 = vpow.pop %v1012
      %v1014 = vmul.f32 %v1011, 1.442695
      %v1015 = vpow.pop %v1014
      %v1016 = vsel %vm1003, %v1013, 0.0
      %1017 = vadd.xlane.f32.xlu0 %v1016
      %v1018 = vpop.xlane.xlu0 %1017
      %v1019 = vsel %vm1003, %v1015, 0.0
      %1020 = vadd.xlane.f32.xlu0 %v1019
      %v1021 = vpop.xlane.xlu0 %1020
      %v1022 = vrcp.pop %v1018
      %v1023 = vrcp.pop %v1021
      %v1024 = vmul.f32 %v1013, %v1022
      %v1025 = vmul.f32 %v1015, %v1023
      %v1026 = vpack.c.bf16 %v1025, %v1024
      %v1029 = vunpack.c.l.b16 %v849
      %v1030 = vunpack.c.l.b16 %v850
      %v1031 = vpack.c.b16 %v1030, %v1029
      %v1034 = vsel %vm1003, %v1026, 0
      %1036 = vmatpush.bf16.msra.mxu0 0
      %1037 = vmatpush.bf16.msra.mxu0 0
      %1038 = vmatpush.bf16.msra.mxu0 0
      %1039 = vmatpush.bf16.msra.mxu0 0
      %1040 = vmatpush.bf16.msra.mxu0 0
      %1041 = vmatpush.bf16.msra.mxu0 0
      %1042 = vmatpush.bf16.msra.mxu0 0
      %1043 = vmatpush.bf16.msra.mxu0 %v1031
      %1044 = vmatmul.bf16.gmra.mxu0 %v1034
      %v1045 = vpop.f32.mrf.mxu0
      %v1046 = vadd.f32 0.0, %v1045
      %v1047 = vpop.f32.mrf.mxu0
      %v1048 = vadd.f32 0.0, %v1047
      %1049 = vdwg.mxu0
      %1050 = vst.msk [vmem:[#allocation2] sm:$0xff] %vm619, %v1046
      %1051 = vst.msk [vmem:[#allocation2 + $0x8] sm:$0xff] %vm619, %v1048
      %1052 = vrot.lane.b32.xlu0 %v419, 80
      %v1053 = vpop.permute.xlu0 %1052
      %1054 = vrot.lane.b32.xlu0 %v420, 80
      %v1055 = vpop.permute.xlu0 %1054
      %v1058 = vmul.f32 %v533, %v1053
      %v1059 = vmul.f32 %v535, %v1055
      %1060 = vrot.lane.b32.xlu0 %v421, 88
      %v1061 = vpop.permute.xlu0 %1060
      %1062 = vrot.lane.b32.xlu0 %v422, 88
      %v1063 = vpop.permute.xlu0 %1062
      %v1066 = vmul.f32 %v533, %v1061
      %v1067 = vmul.f32 %v535, %v1063
      %1070 = vrot.lane.b32.xlu0 %v1066, 120
      %v1071 = vpop.permute.xlu0 %1070
      %1072 = vrot.lane.b32.xlu0 %v1067, 120
      %v1073 = vpop.permute.xlu0 %1072
      %v1076 = vsub.f32 %v1058, %v1071
      %v1077 = vsub.f32 %v1059, %v1073
      %v1078 = vpack.c.bf16 %v1077, %v1076
      %1079 = vrot.lane.b32.xlu0 %v421, 80
      %v1080 = vpop.permute.xlu0 %1079
      %1081 = vrot.lane.b32.xlu0 %v422, 80
      %v1082 = vpop.permute.xlu0 %1081
      %v1085 = vmul.f32 %v533, %v1080
      %v1086 = vmul.f32 %v535, %v1082
      %1087 = vrot.lane.b32.xlu0 %v419, 88
      %v1088 = vpop.permute.xlu0 %1087
      %1089 = vrot.lane.b32.xlu0 %v420, 88
      %v1090 = vpop.permute.xlu0 %1089
      %v1093 = vmul.f32 %v533, %v1088
      %v1094 = vmul.f32 %v535, %v1090
      %1097 = vrot.lane.b32.xlu0 %v1093, 120
      %v1098 = vpop.permute.xlu0 %1097
      %1099 = vrot.lane.b32.xlu0 %v1094, 120
      %v1100 = vpop.permute.xlu0 %1099
      %v1103 = vadd.f32 %v1085, %v1098
      %v1104 = vadd.f32 %v1086, %v1100
      %v1105 = vpack.c.bf16 %v1104, %v1103
      %1107 = vrot.lane.b32.xlu0 %v1078, 48
      %v1108 = vpop.permute.xlu0 %1107
      %v1110 = vsel %vm921, %v1108, 0
      %1112 = vmatpush.bf16.xpose.msra.mxu0 0
      %1113 = vmatpush.bf16.xpose.msra.mxu0 0
      %1114 = vmatpush.bf16.xpose.msra.mxu0 0
      %1115 = vmatpush.bf16.xpose.msra.mxu0 0
      %1116 = vmatpush.bf16.xpose.msra.mxu0 0
      %1117 = vmatpush.bf16.xpose.msra.mxu0 0
      %1118 = vmatpush.bf16.xpose.msra.mxu0 0
      %1119 = vmatpush.bf16.xpose.msra.mxu0 %v926
      %1120 = vmatmul.bf16.gmra.mxu0 %v1110
      %v1121 = vpop.f32.mrf.mxu0
      %v1122 = vadd.f32 0.0, %v1121
      %v1123 = vpop.f32.mrf.mxu0
      %v1124 = vadd.f32 0.0, %v1123
      %1125 = vdwg.mxu0
      %1127 = vrot.lane.b32.xlu0 %v860, 80
      %v1128 = vpop.permute.xlu0 %1127
      %v1133 = vunpack.c.l.b16 %v807
      %v1134 = vunpack.c.l.b16 %v808
      %v1135 = vunpack.c.l.b16 %v809
      %v1136 = vunpack.c.l.b16 %v810
      %v1137 = vpack.c.b16 %v1134, %v1133
      %v1138 = vpack.c.b16 %v1136, %v1135
      %v1142 = vsel %vm619, %v1128, 0
      %1144 = vmatpush.bf16.msra.mxu0 0
      %1145 = vmatpush.bf16.msra.mxu0 0
      %1146 = vmatpush.bf16.msra.mxu0 0
      %1147 = vmatpush.bf16.msra.mxu0 0
      %1148 = vmatpush.bf16.msra.mxu0 0
      %1149 = vmatpush.bf16.msra.mxu0 0
      %1150 = vmatpush.bf16.msra.mxu0 %v1138
      %1151 = vmatpush.bf16.msra.mxu0 %v1137
      %1152 = vmatmul.bf16.gmra.mxu0 %v1142
      %v1153 = vpop.f32.mrf.mxu0
      %v1154 = vadd.f32 %v1122, %v1153
      %v1155 = vpop.f32.mrf.mxu0
      %v1156 = vadd.f32 %v1124, %v1155
      %1157 = vdwg.mxu0
      %1159 = vrot.lane.b32.xlu0 %v1105, 48
      %v1160 = vpop.permute.xlu0 %1159
      %v1162 = vsel %vm921, %v1160, 0
      %1164 = vmatpush.bf16.xpose.msra.mxu0 0
      %1165 = vmatpush.bf16.xpose.msra.mxu0 0
      %1166 = vmatpush.bf16.xpose.msra.mxu0 0
      %1167 = vmatpush.bf16.xpose.msra.mxu0 0
      %1168 = vmatpush.bf16.xpose.msra.mxu0 0
      %1169 = vmatpush.bf16.xpose.msra.mxu0 0
      %1170 = vmatpush.bf16.xpose.msra.mxu0 0
      %1171 = vmatpush.bf16.xpose.msra.mxu0 %v981
      %1172 = vmatmul.bf16.gmra.mxu0 %v1162
      %v1173 = vpop.f32.mrf.mxu0
      %v1174 = vadd.f32 0.0, %v1173
      %v1175 = vpop.f32.mrf.mxu0
      %v1176 = vadd.f32 0.0, %v1175
      %1177 = vdwg.mxu0
      %v1178 = vadd.f32 %v1154, %v1174
      %v1179 = vadd.f32 %v1156, %v1176
      %v1180 = vmul.f32 %v1178, 0.14433756
      %v1181 = vmul.f32 %v1179, 0.14433756
      %v1182 = vadd.f32 %v1180, %v858
      %v1183 = vadd.f32 %v1181, %v859
      %v1184 = vsel %vm1003, %v1182, -inf
      %1185 = vmax.xlane.f32.xlu0 %v1184
      %v1186 = vpop.xlane.xlu0 %1185
      %v1187 = vsel %vm1003, %v1183, -inf
      %1188 = vmax.xlane.f32.xlu0 %v1187
      %v1189 = vpop.xlane.xlu0 %1188
      %v1190 = vsub.f32 %v1182, %v1186
      %v1191 = vsub.f32 %v1183, %v1189
      %v1192 = vmul.f32 %v1190, 1.442695
      %v1193 = vpow.pop %v1192
      %v1194 = vmul.f32 %v1191, 1.442695
      %v1195 = vpow.pop %v1194
      %v1196 = vsel %vm1003, %v1193, 0.0
      %1197 = vadd.xlane.f32.xlu0 %v1196
      %v1198 = vpop.xlane.xlu0 %1197
      %v1199 = vsel %vm1003, %v1195, 0.0
      %1200 = vadd.xlane.f32.xlu0 %v1199
      %v1201 = vpop.xlane.xlu0 %1200
      %v1202 = vrcp.pop %v1198
      %v1203 = vrcp.pop %v1201
      %v1204 = vmul.f32 %v1193, %v1202
      %v1205 = vmul.f32 %v1195, %v1203
      %v1206 = vpack.c.bf16 %v1205, %v1204
      %1207 = vrot.lane.b32.xlu0 %v1031, 96
      %v1208 = vpop.permute.xlu0 %1207
      %v1211 = vsel %vm1003, %v1206, 0
      %1213 = vmatpush.bf16.msra.mxu0 0
      %1214 = vmatpush.bf16.msra.mxu0 0
      %1215 = vmatpush.bf16.msra.mxu0 0
      %1216 = vmatpush.bf16.msra.mxu0 0
      %1217 = vmatpush.bf16.msra.mxu0 0
      %1218 = vmatpush.bf16.msra.mxu0 0
      %1219 = vmatpush.bf16.msra.mxu0 0
      %1220 = vmatpush.bf16.msra.mxu0 %v1208
      %1221 = vmatmul.bf16.gmra.mxu0 %v1211
      %v1222 = vpop.f32.mrf.mxu0
      %v1223 = vadd.f32 0.0, %v1222
      %v1224 = vpop.f32.mrf.mxu0
      %v1225 = vadd.f32 0.0, %v1224
      %1226 = vdwg.mxu0
      %1229 = vrot.lane.b32.xlu0 %v1223, 32
      %v1230 = vpop.permute.xlu0 %1229
      %1231 = vrot.lane.b32.xlu0 %v1225, 32
      %v1232 = vpop.permute.xlu0 %1231
      %vm1235 = vcmask 523520
      %1236 = vst.msk [vmem:[#allocation2] sm:$0xff] %vm1235, %v1230
      %1237 = vst.msk [vmem:[#allocation2 + $0x8] sm:$0xff] %vm1235, %v1232
      %v1238 = vmul.f32 %v547, %v419
      %v1239 = vmul.f32 %v549, %v420
      %1240 = vrot.lane.b32.xlu0 %v421, 8
      %v1241 = vpop.permute.xlu0 %1240
      %1242 = vrot.lane.b32.xlu0 %v422, 8
      %v1243 = vpop.permute.xlu0 %1242
      %v1246 = vmul.f32 %v547, %v1241
      %v1247 = vmul.f32 %v549, %v1243
      %1250 = vrot.lane.b32.xlu0 %v1246, 120
      %v1251 = vpop.permute.xlu0 %1250
      %1252 = vrot.lane.b32.xlu0 %v1247, 120
      %v1253 = vpop.permute.xlu0 %1252
      %v1256 = vsub.f32 %v1238, %v1251
      %v1257 = vsub.f32 %v1239, %v1253
      %v1258 = vpack.c.bf16 %v1257, %v1256
      %v1259 = vmul.f32 %v547, %v421
      %v1260 = vmul.f32 %v549, %v422
      %1261 = vrot.lane.b32.xlu0 %v419, 8
      %v1262 = vpop.permute.xlu0 %1261
      %1263 = vrot.lane.b32.xlu0 %v420, 8
      %v1264 = vpop.permute.xlu0 %1263
      %v1267 = vmul.f32 %v547, %v1262
      %v1268 = vmul.f32 %v549, %v1264
      %1271 = vrot.lane.b32.xlu0 %v1267, 120
      %v1272 = vpop.permute.xlu0 %1271
      %1273 = vrot.lane.b32.xlu0 %v1268, 120
      %v1274 = vpop.permute.xlu0 %1273
      %v1277 = vadd.f32 %v1259, %v1272
      %v1278 = vadd.f32 %v1260, %v1274
      %v1279 = vpack.c.bf16 %v1278, %v1277
      %v1281 = vsel %vm921, %v1258, 0
      %1283 = vmatpush.bf16.xpose.msra.mxu0 0
      %1284 = vmatpush.bf16.xpose.msra.mxu0 0
      %1285 = vmatpush.bf16.xpose.msra.mxu0 0
      %1286 = vmatpush.bf16.xpose.msra.mxu0 0
      %1287 = vmatpush.bf16.xpose.msra.mxu0 0
      %1288 = vmatpush.bf16.xpose.msra.mxu0 0
      %1289 = vmatpush.bf16.xpose.msra.mxu0 0
      %1290 = vmatpush.bf16.xpose.msra.mxu0 %v926
      %1291 = vmatmul.bf16.gmra.mxu0 %v1281
      %v1292 = vpop.f32.mrf.mxu0
      %v1293 = vadd.f32 0.0, %v1292
      %v1294 = vpop.f32.mrf.mxu0
      %v1295 = vadd.f32 0.0, %v1294
      %1296 = vdwg.mxu0
      %1297 = vrot.lane.b32.xlu0 %v860, 32
      %v1298 = vpop.permute.xlu0 %1297
      %v1303 = vunpack.c.l.b16 %v811
      %v1304 = vunpack.c.l.b16 %v812
      %v1305 = vunpack.c.l.b16 %v813
      %v1306 = vunpack.c.l.b16 %v814
      %v1307 = vpack.c.b16 %v1304, %v1303
      %v1308 = vpack.c.b16 %v1306, %v1305
      %v1312 = vsel %vm619, %v1298, 0
      %1314 = vmatpush.bf16.msra.mxu0 0
      %1315 = vmatpush.bf16.msra.mxu0 0
      %1316 = vmatpush.bf16.msra.mxu0 0
      %1317 = vmatpush.bf16.msra.mxu0 0
      %1318 = vmatpush.bf16.msra.mxu0 0
      %1319 = vmatpush.bf16.msra.mxu0 0
      %1320 = vmatpush.bf16.msra.mxu0 %v1308
      %1321 = vmatpush.bf16.msra.mxu0 %v1307
      %1322 = vmatmul.bf16.gmra.mxu0 %v1312
      %v1323 = vpop.f32.mrf.mxu0
      %v1324 = vadd.f32 %v1293, %v1323
      %v1325 = vpop.f32.mrf.mxu0
      %v1326 = vadd.f32 %v1295, %v1325
      %1327 = vdwg.mxu0
      %v1329 = vsel %vm921, %v1279, 0
      %1331 = vmatpush.bf16.xpose.msra.mxu0 0
      %1332 = vmatpush.bf16.xpose.msra.mxu0 0
      %1333 = vmatpush.bf16.xpose.msra.mxu0 0
      %1334 = vmatpush.bf16.xpose.msra.mxu0 0
      %1335 = vmatpush.bf16.xpose.msra.mxu0 0
      %1336 = vmatpush.bf16.xpose.msra.mxu0 0
      %1337 = vmatpush.bf16.xpose.msra.mxu0 0
      %1338 = vmatpush.bf16.xpose.msra.mxu0 %v981
      %1339 = vmatmul.bf16.gmra.mxu0 %v1329
      %v1340 = vpop.f32.mrf.mxu0
      %v1341 = vadd.f32 0.0, %v1340
      %v1342 = vpop.f32.mrf.mxu0
      %v1343 = vadd.f32 0.0, %v1342
      %1344 = vdwg.mxu0
      %v1345 = vadd.f32 %v1324, %v1341
      %v1346 = vadd.f32 %v1326, %v1343
      %v1347 = vmul.f32 %v1345, 0.14433756
      %v1348 = vmul.f32 %v1346, 0.14433756
      %v1349 = vadd.f32 %v1347, %v858
      %v1350 = vadd.f32 %v1348, %v859
      %v1351 = vsel %vm1003, %v1349, -inf
      %1352 = vmax.xlane.f32.xlu0 %v1351
      %v1353 = vpop.xlane.xlu0 %1352
      %v1354 = vsel %vm1003, %v1350, -inf
      %1355 = vmax.xlane.f32.xlu0 %v1354
      %v1356 = vpop.xlane.xlu0 %1355
      %v1357 = vsub.f32 %v1349, %v1353
      %v1358 = vsub.f32 %v1350, %v1356
      %v1359 = vmul.f32 %v1357, 1.442695
      %v1360 = vpow.pop %v1359
      %v1361 = vmul.f32 %v1358, 1.442695
      %v1362 = vpow.pop %v1361
      %v1363 = vsel %vm1003, %v1360, 0.0
      %1364 = vadd.xlane.f32.xlu0 %v1363
      %v1365 = vpop.xlane.xlu0 %1364
      %v1366 = vsel %vm1003, %v1362, 0.0
      %1367 = vadd.xlane.f32.xlu0 %v1366
      %v1368 = vpop.xlane.xlu0 %1367
      %v1369 = vrcp.pop %v1365
      %v1370 = vrcp.pop %v1368
      %v1371 = vmul.f32 %v1360, %v1369
      %v1372 = vmul.f32 %v1362, %v1370
      %v1373 = vpack.c.bf16 %v1372, %v1371
      %1374 = vrot.lane.b32.xlu0 %v1031, 64
      %v1375 = vpop.permute.xlu0 %1374
      %v1378 = vsel %vm1003, %v1373, 0
      %1380 = vmatpush.bf16.msra.mxu0 0
      %1381 = vmatpush.bf16.msra.mxu0 0
      %1382 = vmatpush.bf16.msra.mxu0 0
      %1383 = vmatpush.bf16.msra.mxu0 0
      %1384 = vmatpush.bf16.msra.mxu0 0
      %1385 = vmatpush.bf16.msra.mxu0 0
      %1386 = vmatpush.bf16.msra.mxu0 0
      %1387 = vmatpush.bf16.msra.mxu0 %v1375
      %1388 = vmatmul.bf16.gmra.mxu0 %v1378
      %v1389 = vpop.f32.mrf.mxu0
      %v1390 = vadd.f32 0.0, %v1389
      %v1391 = vpop.f32.mrf.mxu0
      %v1392 = vadd.f32 0.0, %v1391
      %1393 = vdwg.mxu0
      %1396 = vrot.lane.b32.xlu0 %v1390, 64
      %v1397 = vpop.permute.xlu0 %1396
      %1398 = vrot.lane.b32.xlu0 %v1392, 64
      %v1399 = vpop.permute.xlu0 %1398
      %vm1402 = vcmask 785920
      %1403 = vst.msk [vmem:[#allocation2] sm:$0xff] %vm1402, %v1397
      %1404 = vst.msk [vmem:[#allocation2 + $0x8] sm:$0xff] %vm1402, %v1399
      %v1405 = vpack.c.bf16 %v549, %v547
      %1406 = vrot.lane.b32.xlu0 %v419, 48
      %v1407 = vpop.permute.xlu0 %1406
      %1408 = vrot.lane.b32.xlu0 %v420, 48
      %v1409 = vpop.permute.xlu0 %1408
      %v1412 = vmul.f32 %v547, %v1407
      %v1413 = vmul.f32 %v549, %v1409
      %1414 = vrot.lane.b32.xlu0 %v421, 56
      %v1415 = vpop.permute.xlu0 %1414
      %1416 = vrot.lane.b32.xlu0 %v422, 56
      %v1417 = vpop.permute.xlu0 %1416
      %v1420 = vmul.f32 %v547, %v1415
      %v1421 = vmul.f32 %v549, %v1417
      %1424 = vrot.lane.b32.xlu0 %v1420, 120
      %v1425 = vpop.permute.xlu0 %1424
      %1426 = vrot.lane.b32.xlu0 %v1421, 120
      %v1427 = vpop.permute.xlu0 %1426
      %v1430 = vsub.f32 %v1412, %v1425
      %v1431 = vsub.f32 %v1413, %v1427
      %v1432 = vpack.c.bf16 %v1431, %v1430
      %1433 = vrot.lane.b32.xlu0 %v421, 48
      %v1434 = vpop.permute.xlu0 %1433
      %1435 = vrot.lane.b32.xlu0 %v422, 48
      %v1436 = vpop.permute.xlu0 %1435
      %v1439 = vmul.f32 %v547, %v1434
      %v1440 = vmul.f32 %v549, %v1436
      %1441 = vrot.lane.b32.xlu0 %v419, 56
      %v1442 = vpop.permute.xlu0 %1441
      %1443 = vrot.lane.b32.xlu0 %v420, 56
      %v1444 = vpop.permute.xlu0 %1443
      %v1447 = vmul.f32 %v547, %v1442
      %v1448 = vmul.f32 %v549, %v1444
      %1451 = vrot.lane.b32.xlu0 %v1447, 120
      %v1452 = vpop.permute.xlu0 %1451
      %1453 = vrot.lane.b32.xlu0 %v1448, 120
      %v1454 = vpop.permute.xlu0 %1453
      %v1457 = vadd.f32 %v1439, %v1452
      %v1458 = vadd.f32 %v1440, %v1454
      %v1459 = vpack.c.bf16 %v1458, %v1457
      %1461 = vrot.lane.b32.xlu0 %v1432, 80
      %v1462 = vpop.permute.xlu0 %1461
      %v1464 = vsel %vm921, %v1462, 0
      %1466 = vmatpush.bf16.xpose.msra.mxu0 0
      %1467 = vmatpush.bf16.xpose.msra.mxu0 0
      %1468 = vmatpush.bf16.xpose.msra.mxu0 0
      %1469 = vmatpush.bf16.xpose.msra.mxu0 0
      %1470 = vmatpush.bf16.xpose.msra.mxu0 0
      %1471 = vmatpush.bf16.xpose.msra.mxu0 0
      %1472 = vmatpush.bf16.xpose.msra.mxu0 0
      %1473 = vmatpush.bf16.xpose.msra.mxu0 %v926
      %1474 = vmatmul.bf16.gmra.mxu0 %v1464
      %v1475 = vpop.f32.mrf.mxu0
      %v1476 = vadd.f32 0.0, %v1475
      %v1477 = vpop.f32.mrf.mxu0
      %v1478 = vadd.f32 0.0, %v1477
      %1479 = vdwg.mxu0
      %1481 = vrot.lane.b32.xlu0 %v1405, 112
      %v1482 = vpop.permute.xlu0 %1481
      %v1487 = vunpack.c.l.b16 %v815
      %v1488 = vunpack.c.l.b16 %v816
      %v1489 = vunpack.c.l.b16 %v817
      %v1490 = vunpack.c.l.b16 %v818
      %v1491 = vpack.c.b16 %v1488, %v1487
      %v1492 = vpack.c.b16 %v1490, %v1489
      %v1496 = vsel %vm619, %v1482, 0
      %1498 = vmatpush.bf16.msra.mxu0 0
      %1499 = vmatpush.bf16.msra.mxu0 0
      %1500 = vmatpush.bf16.msra.mxu0 0
      %1501 = vmatpush.bf16.msra.mxu0 0
      %1502 = vmatpush.bf16.msra.mxu0 0
      %1503 = vmatpush.bf16.msra.mxu0 0
      %1504 = vmatpush.bf16.msra.mxu0 %v1492
      %1505 = vmatpush.bf16.msra.mxu0 %v1491
      %1506 = vmatmul.bf16.gmra.mxu0 %v1496
      %v1507 = vpop.f32.mrf.mxu0
      %v1508 = vadd.f32 %v1476, %v1507
      %v1509 = vpop.f32.mrf.mxu0
      %v1510 = vadd.f32 %v1478, %v1509
      %1511 = vdwg.mxu0
      %1513 = vrot.lane.b32.xlu0 %v1459, 80
      %v1514 = vpop.permute.xlu0 %1513
      %v1516 = vsel %vm921, %v1514, 0
      %1518 = vmatpush.bf16.xpose.msra.mxu0 0
      %1519 = vmatpush.bf16.xpose.msra.mxu0 0
      %1520 = vmatpush.bf16.xpose.msra.mxu0 0
      %1521 = vmatpush.bf16.xpose.msra.mxu0 0
      %1522 = vmatpush.bf16.xpose.msra.mxu0 0
      %1523 = vmatpush.bf16.xpose.msra.mxu0 0
      %1524 = vmatpush.bf16.xpose.msra.mxu0 0
      %1525 = vmatpush.bf16.xpose.msra.mxu0 %v981
      %1526 = vmatmul.bf16.gmra.mxu0 %v1516
      %v1527 = vpop.f32.mrf.mxu0
      %v1528 = vadd.f32 0.0, %v1527
      %v1529 = vpop.f32.mrf.mxu0
      %v1530 = vadd.f32 0.0, %v1529
      %1531 = vdwg.mxu0
      %v1532 = vadd.f32 %v1508, %v1528
      %v1533 = vadd.f32 %v1510, %v1530
      %v1534 = vmul.f32 %v1532, 0.14433756
      %v1535 = vmul.f32 %v1533, 0.14433756
      %v1536 = vadd.f32 %v1534, %v858
      %v1537 = vadd.f32 %v1535, %v859
      %v1538 = vsel %vm1003, %v1536, -inf
      %1539 = vmax.xlane.f32.xlu0 %v1538
      %v1540 = vpop.xlane.xlu0 %1539
      %v1541 = vsel %vm1003, %v1537, -inf
      %1542 = vmax.xlane.f32.xlu0 %v1541
      %v1543 = vpop.xlane.xlu0 %1542
      %v1544 = vsub.f32 %v1536, %v1540
      %v1545 = vsub.f32 %v1537, %v1543
      %v1546 = vmul.f32 %v1544, 1.442695
      %v1547 = vpow.pop %v1546
      %v1548 = vmul.f32 %v1545, 1.442695
      %v1549 = vpow.pop %v1548
      %v1550 = vsel %vm1003, %v1547, 0.0
      %1551 = vadd.xlane.f32.xlu0 %v1550
      %v1552 = vpop.xlane.xlu0 %1551
      %v1553 = vsel %vm1003, %v1549, 0.0
      %1554 = vadd.xlane.f32.xlu0 %v1553
      %v1555 = vpop.xlane.xlu0 %1554
      %v1556 = vrcp.pop %v1552
      %v1557 = vrcp.pop %v1555
      %v1558 = vmul.f32 %v1547, %v1556
      %v1559 = vmul.f32 %v1549, %v1557
      %v1560 = vpack.c.bf16 %v1559, %v1558
      %1561 = vrot.lane.b32.xlu0 %v1031, 32
      %v1562 = vpop.permute.xlu0 %1561
      %v1565 = vsel %vm1003, %v1560, 0
      %1567 = vmatpush.bf16.msra.mxu0 0
      %1568 = vmatpush.bf16.msra.mxu0 0
      %1569 = vmatpush.bf16.msra.mxu0 0
      %1570 = vmatpush.bf16.msra.mxu0 0
      %1571 = vmatpush.bf16.msra.mxu0 0
      %1572 = vmatpush.bf16.msra.mxu0 0
      %1573 = vmatpush.bf16.msra.mxu0 0
      %1574 = vmatpush.bf16.msra.mxu0 %v1562
      %1575 = vmatmul.bf16.gmra.mxu0 %v1565
      %v1576 = vpop.f32.mrf.mxu0
      %v1577 = vadd.f32 0.0, %v1576
      %v1578 = vpop.f32.mrf.mxu0
      %v1579 = vadd.f32 0.0, %v1578
      %1580 = vdwg.mxu0
      %1583 = vrot.lane.b32.xlu0 %v1577, 96
      %v1584 = vpop.permute.xlu0 %1583
      %1585 = vrot.lane.b32.xlu0 %v1579, 96
      %v1586 = vpop.permute.xlu0 %1585
      %vm1589 = vcmask 1048320
      %1590 = vst.msk [vmem:[#allocation2] sm:$0xff] %vm1589, %v1584
      %1591 = vst.msk [vmem:[#allocation2 + $0x8] sm:$0xff] %vm1589, %v1586
      %v1592 = vld [vmem:[#allocation2] sm:$0xff]
      %v1593 = vld [vmem:[#allocation2 + $0x8] sm:$0xff]
      %v1594 = vpack.c.bf16 %v1593, %v1592
      %v1595 = vld [vmem:[%s8] sm:$0xf]
      %v1596 = vld [vmem:[%s8 + $0x4] sm:$0xf]
      %v1597 = vld [vmem:[%s8 + $0x8] sm:$0xf]
      %v1598 = vld [vmem:[%s8 + $0xc] sm:$0xf]
      %v1599 = vld [vmem:[%s8 + $0x10] sm:$0xf]
      %v1600 = vld [vmem:[%s8 + $0x14] sm:$0xf]
      %v1601 = vld [vmem:[%s8 + $0x18] sm:$0xf]
      %v1602 = vld [vmem:[%s8 + $0x1c] sm:$0xf]
      %v1603 = vld [vmem:[%s8 + $0x20] sm:$0xf]
      %v1604 = vld [vmem:[%s8 + $0x24] sm:$0xf]
      %v1605 = vld [vmem:[%s8 + $0x28] sm:$0xf]
      %v1606 = vld [vmem:[%s8 + $0x2c] sm:$0xf]
      %v1607 = vld [vmem:[%s8 + $0x30] sm:$0xf]
      %v1608 = vld [vmem:[%s8 + $0x34] sm:$0xf]
      %v1609 = vld [vmem:[%s8 + $0x38] sm:$0xf]
      %v1610 = vld [vmem:[%s8 + $0x3c] sm:$0xf]
      %v1627 = vunpack.c.l.b16 %v1595
      %v1628 = vunpack.c.l.b16 %v1596
      %v1629 = vunpack.c.l.b16 %v1597
      %v1630 = vunpack.c.l.b16 %v1598
      %v1631 = vunpack.c.l.b16 %v1599
      %v1632 = vunpack.c.l.b16 %v1600
      %v1633 = vunpack.c.l.b16 %v1601
      %v1634 = vunpack.c.l.b16 %v1602
      %v1635 = vunpack.c.l.b16 %v1603
      %v1636 = vunpack.c.l.b16 %v1604
      %v1637 = vunpack.c.l.b16 %v1605
      %v1638 = vunpack.c.l.b16 %v1606
      %v1639 = vunpack.c.l.b16 %v1607
      %v1640 = vunpack.c.l.b16 %v1608
      %v1641 = vunpack.c.l.b16 %v1609
      %v1642 = vunpack.c.l.b16 %v1610
      %v1643 = vpack.c.b16 %v1628, %v1627
      %v1644 = vpack.c.b16 %v1630, %v1629
      %v1645 = vpack.c.b16 %v1632, %v1631
      %v1646 = vpack.c.b16 %v1634, %v1633
      %v1647 = vpack.c.b16 %v1636, %v1635
      %v1648 = vpack.c.b16 %v1638, %v1637
      %v1649 = vpack.c.b16 %v1640, %v1639
      %v1650 = vpack.c.b16 %v1642, %v1641
      %1659 = vmatpush.bf16.msra.mxu0 %v1650
      %1660 = vmatpush.bf16.msra.mxu0 %v1649
      %1661 = vmatpush.bf16.msra.mxu0 %v1648
      %1662 = vmatpush.bf16.msra.mxu0 %v1647
      %1663 = vmatpush.bf16.msra.mxu0 %v1646
      %1664 = vmatpush.bf16.msra.mxu0 %v1645
      %1665 = vmatpush.bf16.msra.mxu0 %v1644
      %1666 = vmatpush.bf16.msra.mxu0 %v1643
      %1667 = vmatmul.bf16.gmra.mxu0 %v1594
      %v1668 = vpop.f32.mrf.mxu0
      %v1669 = vadd.f32 0.0, %v1668
      %v1670 = vpop.f32.mrf.mxu0
      %v1671 = vadd.f32 0.0, %v1670
      %1672 = vdwg.mxu0
      %v1673 = vadd.f32 %v417, %v1669
      %v1674 = vadd.f32 %v418, %v1671
      %v1675 = vmul.f32 %v1673, %v1673
      %v1676 = vmul.f32 %v1674, %v1674
      %v1677 = vsel %vm425, %v1675, 0.0
      %1678 = vadd.xlane.f32.xlu0 %v1677
      %v1679 = vpop.xlane.xlu0 %1678
      %v1680 = vsel %vm425, %v1676, 0.0
      %1681 = vadd.xlane.f32.xlu0 %v1680
      %v1682 = vpop.xlane.xlu0 %1681
      %v1683 = vmul.f32 %v1679, %v438
      %v1684 = vmul.f32 %v1682, %v438
      %v1685 = vadd.f32 %v1683, 1e-06
      %v1686 = vadd.f32 %v1684, 1e-06
      %v1687 = vrsqrt.pop %v1685
      %v1688 = vmul.f32 %v1687, %v1685
      %v1689 = vmul.f32 %v1688, %v1687
      %v1690 = vmul.f32 0.5, %v1689
      %v1691 = vsub.f32 1.5, %v1690
      %v1692 = vmul.f32 %v1687, %v1691
      %vm1693 = vweird.f32 %v1685
      %vm1694 = vweird.f32 %v1687
      %vm1695 = vmor %vm1693, %vm1694
      %v1696 = vsel %vm1695, %v1687, %v1692
      %v1697 = vrsqrt.pop %v1686
      %v1698 = vmul.f32 %v1697, %v1686
      %v1699 = vmul.f32 %v1698, %v1697
      %v1700 = vmul.f32 0.5, %v1699
      %v1701 = vsub.f32 1.5, %v1700
      %v1702 = vmul.f32 %v1697, %v1701
      %vm1703 = vweird.f32 %v1686
      %vm1704 = vweird.f32 %v1697
      %vm1705 = vmor %vm1703, %vm1704
      %v1706 = vsel %vm1705, %v1697, %v1702
      %v1707 = vmul.f32 %v1673, %v1696
      %v1708 = vmul.f32 %v1674, %v1706
      %v1709 = vld [vmem:[%s9] sm:$0x1]
      %v1711 = vperm.slane %v1709, 0
      %v1713 = vmul.f32 %v1707, %v1711
      %v1714 = vmul.f32 %v1708, %v1711
      %v1715 = vpack.c.bf16 %v1714, %v1713
      %v1716 = vld [vmem:[%s10] sm:$0xff]
      %v1717 = vld [vmem:[%s10 + $0x8] sm:$0xff]
      %v1718 = vld [vmem:[%s10 + $0x10] sm:$0xff]
      %v1719 = vld [vmem:[%s10 + $0x18] sm:$0xff]
      %v1720 = vld [vmem:[%s10 + $0x20] sm:$0xff]
      %v1721 = vld [vmem:[%s10 + $0x28] sm:$0xff]
      %v1722 = vld [vmem:[%s10 + $0x30] sm:$0xff]
      %v1723 = vld [vmem:[%s10 + $0x38] sm:$0xff]
      %v1732 = vunpack.c.l.b16 %v1716
      %v1733 = vunpack.c.h.b16 %v1716
      %v1734 = vunpack.c.l.b16 %v1717
      %v1735 = vunpack.c.h.b16 %v1717
      %v1736 = vunpack.c.l.b16 %v1718
      %v1737 = vunpack.c.h.b16 %v1718
      %v1738 = vunpack.c.l.b16 %v1719
      %v1739 = vunpack.c.h.b16 %v1719
      %v1740 = vunpack.c.l.b16 %v1720
      %v1741 = vunpack.c.h.b16 %v1720
      %v1742 = vunpack.c.l.b16 %v1721
      %v1743 = vunpack.c.h.b16 %v1721
      %v1744 = vunpack.c.l.b16 %v1722
      %v1745 = vunpack.c.h.b16 %v1722
      %v1746 = vunpack.c.l.b16 %v1723
      %v1747 = vunpack.c.h.b16 %v1723
      %v1748 = vpack.c.b16 %v1734, %v1732
      %v1749 = vpack.c.b16 %v1735, %v1733
      %v1750 = vpack.c.b16 %v1738, %v1736
      %v1751 = vpack.c.b16 %v1739, %v1737
      %v1752 = vpack.c.b16 %v1742, %v1740
      %v1753 = vpack.c.b16 %v1743, %v1741
      %v1754 = vpack.c.b16 %v1746, %v1744
      %v1755 = vpack.c.b16 %v1747, %v1745
      %v1765 = vsel %vm425, %v1715, 0
      %1767 = vmatpush.bf16.msra.mxu0 0
      %1768 = vmatpush.bf16.msra.mxu0 0
      %1769 = vmatpush.bf16.msra.mxu0 0
      %1770 = vmatpush.bf16.msra.mxu0 0
      %1771 = vmatpush.bf16.msra.mxu0 %v1754
      %1772 = vmatpush.bf16.msra.mxu0 %v1752
      %1773 = vmatpush.bf16.msra.mxu0 %v1750
      %1774 = vmatpush.bf16.msra.mxu0 %v1748
      %1775 = vmatmul.bf16.gmra.mxu0 %v1765
      %v1776 = vpop.f32.mrf.mxu0
      %v1777 = vadd.f32 0.0, %v1776
      %v1778 = vpop.f32.mrf.mxu0
      %v1779 = vadd.f32 0.0, %v1778
      %1780 = vdwg.mxu0
      %1781 = vmatpush.bf16.msra.mxu0 0
      %1782 = vmatpush.bf16.msra.mxu0 0
      %1783 = vmatpush.bf16.msra.mxu0 0
      %1784 = vmatpush.bf16.msra.mxu0 0
      %1785 = vmatpush.bf16.msra.mxu0 %v1755
      %1786 = vmatpush.bf16.msra.mxu0 %v1753
      %1787 = vmatpush.bf16.msra.mxu0 %v1751
      %1788 = vmatpush.bf16.msra.mxu0 %v1749
      %1789 = vmatmul.bf16.gmra.mxu0 %v1765
      %v1790 = vpop.f32.mrf.mxu0
      %v1791 = vadd.f32 0.0, %v1790
      %v1792 = vpop.f32.mrf.mxu0
      %v1793 = vadd.f32 0.0, %v1792
      %1794 = vdwg.mxu0
      %v1795 = vxor.u32 %v1777, 2147483648
      %v1796 = vxor.u32 %v1779, 2147483648
      %v1797 = vmul.f32 %v1795, 1.442695
      %v1798 = vpow.pop %v1797
      %v1799 = vmul.f32 %v1796, 1.442695
      %v1800 = vpow.pop %v1799
      %v1801 = vadd.f32 %v1798, 1.0
      %v1802 = vadd.f32 %v1800, 1.0
      %v1803 = vrcp.pop %v1801
      %v1804 = vmul.f32 %v1801, %v1803
      %v1805 = vsub.f32 1.0, %v1804
      %v1806 = vmul.f32 %v1803, %v1805
      %v1807 = vadd.f32 %v1803, %v1806
      %vm1808 = vweird.f32 %v1801
      %vm1809 = vweird.f32 %v1803
      %vm1810 = vmor %vm1808, %vm1809
      %v1811 = vsel %vm1810, %v1803, %v1807
      %v1812 = vand.u32 2147483647, %v1801
      %vm1813 = vcmp.eq.f32.partialorder %v1812, 8.507059e+37
      %v1814 = vand.u32 %v1801, 2147483648
      %v1815 = vor.u32 1.1754944e-38, %v1814
      %v1816 = vsel %vm1813, %v1815, %v1811
      %v1817 = vmul.f32 1.0, %v1816
      %v1818 = vrcp.pop %v1802
      %v1819 = vmul.f32 %v1802, %v1818
      %v1820 = vsub.f32 1.0, %v1819
      %v1821 = vmul.f32 %v1818, %v1820
      %v1822 = vadd.f32 %v1818, %v1821
      %vm1823 = vweird.f32 %v1802
      %vm1824 = vweird.f32 %v1818
      %vm1825 = vmor %vm1823, %vm1824
      %v1826 = vsel %vm1825, %v1818, %v1822
      %v1827 = vand.u32 2147483647, %v1802
      %vm1828 = vcmp.eq.f32.partialorder %v1827, 8.507059e+37
      %v1829 = vand.u32 %v1802, 2147483648
      %v1830 = vor.u32 1.1754944e-38, %v1829
      %v1831 = vsel %vm1828, %v1830, %v1826
      %v1832 = vmul.f32 1.0, %v1831
      %v1833 = vmul.f32 %v1777, %v1817
      %v1834 = vmul.f32 %v1779, %v1832
      %v1835 = vmul.f32 %v1833, %v1791
      %v1836 = vmul.f32 %v1834, %v1793
      %v1837 = vpack.c.bf16 %v1836, %v1835
      %v1838 = vld [vmem:[%s11] sm:$0xf]
      %v1839 = vld [vmem:[%s11 + $0x4] sm:$0xf]
      %v1840 = vld [vmem:[%s11 + $0x8] sm:$0xf]
      %v1841 = vld [vmem:[%s11 + $0xc] sm:$0xf]
      %v1842 = vld [vmem:[%s11 + $0x10] sm:$0xf]
      %v1843 = vld [vmem:[%s11 + $0x14] sm:$0xf]
      %v1844 = vld [vmem:[%s11 + $0x18] sm:$0xf]
      %v1845 = vld [vmem:[%s11 + $0x1c] sm:$0xf]
      %v1846 = vld [vmem:[%s11 + $0x20] sm:$0xf]
      %v1847 = vld [vmem:[%s11 + $0x24] sm:$0xf]
      %v1848 = vld [vmem:[%s11 + $0x28] sm:$0xf]
      %v1849 = vld [vmem:[%s11 + $0x2c] sm:$0xf]
      %v1850 = vld [vmem:[%s11 + $0x30] sm:$0xf]
      %v1851 = vld [vmem:[%s11 + $0x34] sm:$0xf]
      %v1852 = vld [vmem:[%s11 + $0x38] sm:$0xf]
      %v1853 = vld [vmem:[%s11 + $0x3c] sm:$0xf]
      %v1870 = vunpack.c.l.b16 %v1838
      %v1871 = vunpack.c.l.b16 %v1839
      %v1872 = vunpack.c.l.b16 %v1840
      %v1873 = vunpack.c.l.b16 %v1841
      %v1874 = vunpack.c.l.b16 %v1842
      %v1875 = vunpack.c.l.b16 %v1843
      %v1876 = vunpack.c.l.b16 %v1844
      %v1877 = vunpack.c.l.b16 %v1845
      %v1878 = vunpack.c.l.b16 %v1846
      %v1879 = vunpack.c.l.b16 %v1847
      %v1880 = vunpack.c.l.b16 %v1848
      %v1881 = vunpack.c.l.b16 %v1849
      %v1882 = vunpack.c.l.b16 %v1850
      %v1883 = vunpack.c.l.b16 %v1851
      %v1884 = vunpack.c.l.b16 %v1852
      %v1885 = vunpack.c.l.b16 %v1853
      %v1886 = vpack.c.b16 %v1871, %v1870
      %v1887 = vpack.c.b16 %v1873, %v1872
      %v1888 = vpack.c.b16 %v1875, %v1874
      %v1889 = vpack.c.b16 %v1877, %v1876
      %v1890 = vpack.c.b16 %v1879, %v1878
      %v1891 = vpack.c.b16 %v1881, %v1880
      %v1892 = vpack.c.b16 %v1883, %v1882
      %v1893 = vpack.c.b16 %v1885, %v1884
      %1902 = vmatpush.bf16.msra.mxu0 %v1893
      %1903 = vmatpush.bf16.msra.mxu0 %v1892
      %1904 = vmatpush.bf16.msra.mxu0 %v1891
      %1905 = vmatpush.bf16.msra.mxu0 %v1890
      %1906 = vmatpush.bf16.msra.mxu0 %v1889
      %1907 = vmatpush.bf16.msra.mxu0 %v1888
      %1908 = vmatpush.bf16.msra.mxu0 %v1887
      %1909 = vmatpush.bf16.msra.mxu0 %v1886
      %1910 = vmatmul.bf16.gmra.mxu0 %v1837
      %v1911 = vpop.f32.mrf.mxu0
      %v1912 = vadd.f32 0.0, %v1911
      %v1913 = vpop.f32.mrf.mxu0
      %v1914 = vadd.f32 0.0, %v1913
      %1915 = vdwg.mxu0
      %v1916 = vadd.f32 %v1673, %v1912
      %v1917 = vadd.f32 %v1674, %v1914
      %v1918 = vpack.c.bf16 %v1916, %v1916
      %v1919 = vpack.c.bf16 %v1917, %v1917
      %vm1920 = vcmask 519168
      %1921 = vst.msk [vmem:[%s413] sm:$0xf] %vm1920, %v1918
      %1922 = vst.msk [vmem:[%s413 + $0x4] sm:$0xf] %vm1920, %v1919
      %p1923 = scmp.lt.s32.totalorder %s23, 1
      %s1924 = scalar_select %p1923, %s23, 1
      %s1925 = smul.addr %s1924, 2
      %s1926 = smul.addr %s1925, 4
      %s1927 = scalar_lea.vmem %s12, %s1926
      // Predicated region
      $region69: #{_lambda_.3} parent=67 // pred_check
        %p1928 = pneg %p298
      $region70: #{_lambda_.3} parent=67 // pred_check_branch
        %1930 = sbr.rel (%p1928) target = $region72
      $region71: #{_lambda_.3} parent=67 // pred_region
        _
      $region72: #{_lambda_.3} parent=67 // pred_fallthru
        _
    $region68: #{_lambda_.3} parent=5 // pred_fallthru
      _
    %p1931 = scmp.le.s32.totalorder 2, %s18
    // Predicated region
    $region73: #{_lambda_.3} parent=5 // pred_check
      %p1932 = pneg %p1931
    $region74: #{_lambda_.3} parent=5 // pred_check_branch
      %1934 = sbr.rel (%p1932) target = $region76
    $region75: #{_lambda_.3} parent=5 // pred_region
      %s1935 = ssub.s32 %s18, 2
      // Predicated region
      $region77: #{_lambda_.3} parent=75 // pred_check
        %p1936 = pneg %p304
      $region78: #{_lambda_.3} parent=75 // pred_check_branch
        %1938 = sbr.rel (%p1936) target = $region80
      $region79: #{_lambda_.3} parent=75 // pred_region
        %p1939 = scmp.lt.s32.totalorder %s24, 1
        %s1940 = scalar_select %p1939, %s24, 1
        %s1941 = smul.addr %s1940, 2
        %s1942 = smul.addr %s1941, 4
        %s1943 = scalar_lea.vmem %s12, %s1942
      $region80: #{_lambda_.3} parent=75 // pred_fallthru
        _
    $region76: #{_lambda_.3} parent=5 // pred_fallthru
      _
  $region6: #{_lambda_.3} parent=0 // loop_footer
    %s22 = sadd.s32 1, %s18
  $region7: #{_lambda_.3} parent=0 // loop_footer_branch
    %17 = sbr.rel target = $region3
  $region8: #{_lambda_.3} parent=0 // loop_exit
    _

</llo_original>
